<compile_context>
chip_gen: v7x
topology: tpu7x:2x2x1
jax: 0.10.0
libtpu: 0.0.40
codegen_flags: <defaults>
</compile_context>

<pallas_src>
import jax
import jax.numpy as jnp
import numpy as np
from jax import lax
from jax.experimental import pallas as pl
from jax.experimental.pallas import tpu as pltpu


LANE = 128            # gate dim (4H) padded to a multiple of this
SUBLANE = 8           # batch / time padded to a multiple of this
T_CHUNK_MAX = 32      # timesteps per pipelined grid step
MAX_UNROLL = 8        # partial unroll of the in-chunk time loop
MAX_STATE_ELEMS = 10 * 1024   # carry (h,c) in vregs only while 2*state <= ~20 vregs of f32


def _round_up(x: int, m: int) -> int:
    return ((x + m - 1) // m) * m


def _sigmoid(x):
    # Explicit form (exp + add + div) -- guaranteed Mosaic lowering, EUP-bound.
    return 1.0 / (1.0 + jnp.exp(-x))


# ---------------------------------------------------------------------------
# Pallas kernel: LSTM recurrence with in-kernel (one-hot matmul) table gather.
# ---------------------------------------------------------------------------
def _make_lstm_kernel(H, Vp, t_chunk, b_block, carry_in_regs, unroll):
    """Builds the kernel body; shapes / flags are compile-time constants."""

    def kernel(idx_ref, proj_ref, whh_ref, out_ref, h_scr, c_scr):
        # idx_ref : (t_chunk, b_block, 1) int32   event indices (time-major), -1 = no-op pad
        # proj_ref: (Vp, Gp)                      fused emb@W_ih^T + bias table (VMEM resident)
        # whh_ref : (H,  Gp)                      W_hh^T, gate-compact columns (VMEM resident)
        # out_ref : (b_block, H)                  final hidden state
        # h_scr, c_scr: (b_block, H) f32          recurrent state, persists across time chunks
        t_blk = pl.program_id(1)

        @pl.when(t_blk == 0)
        def _init():
            h_scr[...] = jnp.zeros_like(h_scr)
            c_scr[...] = jnp.zeros_like(c_scr)

        def cell(tt, h, c):
            # In-kernel gather: exact one-hot row select from the resident proj_table.
            # Independent of h, so it overlaps with the previous step's recurrence matmul.
            idx_t = idx_ref[tt]                                          # (b_block, 1) int32
            onehot = (idx_t == lax.broadcasted_iota(jnp.int32, (b_block, Vp), 1)
                      ).astype(proj_ref.dtype)                           # (b_block, Vp)
            gates = (jnp.dot(onehot, proj_ref[...], preferred_element_type=jnp.float32)
                     + jnp.dot(h.astype(whh_ref.dtype), whh_ref[...],
                               preferred_element_type=jnp.float32))      # (b_block, Gp)
            i_g = _sigmoid(gates[:, 0 * H:1 * H])
            f_g = _sigmoid(gates[:, 1 * H:2 * H])
            g_g = jnp.tanh(gates[:, 2 * H:3 * H])
            o_g = _sigmoid(gates[:, 3 * H:4 * H])
            c_new = f_g * c + i_g * g_g
            h_new = o_g * jnp.tanh(c_new)
            return h_new, c_new

        if carry_in_regs:
            # Register-carried (h, c) inside the chunk; scratch touched only at entry/exit.
            def step(tt, carry):
                return cell(tt, *carry)
            h, c = lax.fori_loop(0, t_chunk, step, (h_scr[...], c_scr[...]), unroll=unroll)
            h_scr[...] = h
            c_scr[...] = c
        else:
            # Large state: keep it in VMEM scratch to avoid vreg spills.
            def step(tt, carry):
                h_new, c_new = cell(tt, h_scr[...], c_scr[...])
                h_scr[...] = h_new
                c_scr[...] = c_new
                return carry
            lax.fori_loop(0, t_chunk, step, 0, unroll=unroll)

        @pl.when(t_blk == pl.num_programs(1) - 1)
        def _finalize():
            out_ref[...] = h_scr[...].astype(out_ref.dtype)

    return kernel


def lstm_final_hidden_pallas(idx3, proj_table, w_hh_t, rnn_dim, b_block, t_chunk):
    """idx3: (S_pad, B_pad, 1) int32 (-1 = no-op pad) -> (B_pad, rnn_dim) f32 final hidden."""
    S_pad, B_pad, _ = idx3.shape
    Vp, Gp = proj_table.shape
    H = rnn_dim
    assert S_pad % t_chunk == 0 and B_pad % b_block == 0
    n_b, n_t = B_pad // b_block, S_pad // t_chunk
    unroll = t_chunk if t_chunk <= MAX_UNROLL else MAX_UNROLL
    carry_in_regs = (b_block * H) <= MAX_STATE_ELEMS

    kernel = _make_lstm_kernel(H, Vp, t_chunk, b_block, carry_in_regs, unroll)

    return pl.pallas_call(
        kernel,
        out_shape=jax.ShapeDtypeStruct((B_pad, H), jnp.float32),
        grid_spec=pltpu.PrefetchScalarGridSpec(
            num_scalar_prefetch=0,
            grid=(n_b, n_t),   # batch blocks (parallel) x time chunks (serial recurrence)
            in_specs=[
                pl.BlockSpec((t_chunk, b_block, 1), lambda b, t: (t, b, 0)),
                pl.BlockSpec((Vp, Gp), lambda b, t: (0, 0)),   # proj_table: VMEM resident
                pl.BlockSpec((H, Gp), lambda b, t: (0, 0)),    # W_hh^T    : VMEM resident
            ],
            out_specs=pl.BlockSpec((b_block, H), lambda b, t: (b, 0)),
            scratch_shapes=[
                pltpu.VMEM((b_block, H), jnp.float32),   # h
                pltpu.VMEM((b_block, H), jnp.float32),   # c
            ],
        ),
        compiler_params=pltpu.CompilerParams(
            dimension_semantics=("parallel", "arbitrary"),
        ),
    )(idx3, proj_table, w_hh_t)


# ---------------------------------------------------------------------------
# Parameter packing: fuse embedding + input projection + bias; compact gate layout.
# ---------------------------------------------------------------------------
def prepare_params(emb_table, w_ih, w_hh, b_ih, b_hh, matmul_dtype=jnp.float32):
    """PyTorch-shaped params -> fused / padded kernel params.

    emb_table: (vocab, E) with row 0 zero (padding_idx=0)
    w_ih: (4H, E)   w_hh: (4H, H)   b_ih, b_hh: (4H,)   gate order [i, f, g, o]
    matmul_dtype: jnp.bfloat16 recommended on v6e/v7x (loosen validation tolerances).
    """
    V, _ = emb_table.shape
    H = w_hh.shape[1]
    Gp = _round_up(4 * H, LANE)
    Vp = _round_up(V, SUBLANE)
    hp = jax.lax.Precision.HIGHEST

    w_ih_t = jnp.asarray(w_ih, jnp.float32).T          # (E, 4H), columns [i|f|g|o]
    w_hh_t = jnp.asarray(w_hh, jnp.float32).T          # (H, 4H)
    bias = jnp.asarray(b_ih, jnp.float32) + jnp.asarray(b_hh, jnp.float32)   # (4H,)

    # Fused table: embedding lookup + x@W_ih^T + bias collapse into one row select.
    proj = jnp.dot(jnp.asarray(emb_table, jnp.float32), w_ih_t, precision=hp) + bias[None, :]

    # Compact gate layout padded as a whole to Gp lanes; pad vocab rows to a sublane multiple.
    proj = jnp.pad(proj, ((0, Vp - V), (0, Gp - 4 * H)))
    w_hh_t = jnp.pad(w_hh_t, ((0, 0), (0, Gp - 4 * H)))

    return {
        "proj_table": proj.astype(matmul_dtype),   # (Vp, Gp)
        "w_hh_t": w_hh_t.astype(matmul_dtype),     # (H, Gp)
        "rnn_dim": H,
    }


# ---------------------------------------------------------------------------
# Forward pass (== EventRepresentModel.forward)
# ---------------------------------------------------------------------------
def event_represent_forward(event_sequence, params):
    """event_sequence: (B, S) int indices (0 = padding token). Returns (B, rnn_dim)."""
    B, S = event_sequence.shape
    H = params["rnn_dim"]

    # Batch block: big enough to feed the MXU; >= 2 blocks when possible so the 'parallel'
    # grid axis can shard across the two v7x TensorCores.
    B_pad = _round_up(B, SUBLANE)
    if B_pad >= 256:
        b_block = 128
        B_pad = _round_up(B_pad, b_block)
    elif B_pad >= 16 and B_pad % 16 == 0:
        b_block = B_pad // 2
    else:
        b_block = B_pad

    S_pad = _round_up(max(S, 1), SUBLANE)
    t_chunk = next(t for t in (T_CHUNK_MAX, 16, 8) if S_pad % t == 0)

    # Time-major indices, front-padded in time / tail-padded in batch with -1.  Index -1
    # selects no proj_table row (zero gate pre-activation) which keeps (h, c) == (0, 0):
    # an exact no-op, so padding never contaminates real rows / steps.
    idx = jnp.asarray(event_sequence, jnp.int32).T                            # (S, B)
    idx = jnp.pad(idx, ((S_pad - S, 0), (0, B_pad - B)), constant_values=-1)  # (S_pad, B_pad)
    idx3 = idx[:, :, None]                                                    # (S_pad, B_pad, 1)

    h_pad = lstm_final_hidden_pallas(idx3, params["proj_table"], params["w_hh_t"],
                                     H, b_block, t_chunk)                     # (B_pad, H)
    # num_layers == 1 -> h_n.transpose(0, 1).reshape(B, -1) == h_n
    return h_pad[:B, :H].reshape(B, -1)


# ---------------------------------------------------------------------------
# Pure-JAX reference (PyTorch semantics) for the correctness check.
# ---------------------------------------------------------------------------
def event_represent_reference(event_sequence, emb_table, w_ih, w_hh, b_ih, b_hh):
    B, S = event_sequence.shape
    H = w_hh.shape[1]
    hp = jax.lax.Precision.HIGHEST
    x = jnp.take(emb_table, event_sequence, axis=0)  # (B, S, E)
    h = jnp.zeros((B, H), jnp.float32)
    c = jnp.zeros((B, H), jnp.float32)

    def step(carry, x_t):
        h, c = carry
        gates = (jnp.dot(x_t, w_ih.T, precision=hp)
                 + jnp.dot(h, w_hh.T, precision=hp)
                 + b_ih + b_hh)
        i_g = jax.nn.sigmoid(gates[:, 0 * H:1 * H])
        f_g = jax.nn.sigmoid(gates[:, 1 * H:2 * H])
        g_g = jnp.tanh(gates[:, 2 * H:3 * H])
        o_g = jax.nn.sigmoid(gates[:, 3 * H:4 * H])
        c = f_g * c + i_g * g_g
        h = o_g * jnp.tanh(c)
        return (h, c), None

    (h, c), _ = lax.scan(step, (h, c), jnp.swapaxes(x, 0, 1))
    return h.reshape(B, -1)


if __name__ == "__main__":
    # Small deterministic config consistent with the module.
    event_type_size = 10
    event_vec_dim = 32       # E
    rnn_dim = 32             # H (PyTorch default is 256; small for the demo)
    rnn_num_layers = 1
    batch = 2
    seq = 8

    key = jax.random.PRNGKey(0)
    k_emb, k_wih, k_whh, k_bih, k_bhh, k_idx = jax.random.split(key, 6)

    # Embedding table (vocab = event_type_size + 1), padding_idx=0 -> row 0 zeroed.
    emb = jax.random.normal(k_emb, (event_type_size + 1, event_vec_dim), jnp.float32) * 0.1
    emb = emb.at[0].set(0.0)

    # LSTM parameters (PyTorch shapes: W_ih (4H,E), W_hh (4H,H), b_ih/b_hh (4H,)).
    scale = 1.0 / np.sqrt(rnn_dim)
    w_ih = jax.random.uniform(k_wih, (4 * rnn_dim, event_vec_dim), jnp.float32, -scale, scale)
    w_hh = jax.random.uniform(k_whh, (4 * rnn_dim, rnn_dim), jnp.float32, -scale, scale)
    b_ih = jax.random.uniform(k_bih, (4 * rnn_dim,), jnp.float32, -scale, scale)
    b_hh = jax.random.uniform(k_bhh, (4 * rnn_dim,), jnp.float32, -scale, scale)

    # f32 kept here for a tight numeric check; use matmul_dtype=jnp.bfloat16 on v6e/v7x.
    params = prepare_params(emb, w_ih, w_hh, b_ih, b_hh, matmul_dtype=jnp.float32)

    # Input event sequence: (batch, seq) int32, 0 = padding index.
    event_sequence = jax.random.randint(
        k_idx, (batch, seq), 0, event_type_size + 1, jnp.int32)

    out = event_represent_forward(event_sequence, params)
    out = jax.block_until_ready(out)

    ref = event_represent_reference(event_sequence, emb, w_ih, w_hh, b_ih, b_hh)

    assert out.shape == (batch, rnn_dim * rnn_num_layers), out.shape
    np.testing.assert_allclose(np.asarray(out), np.asarray(ref), rtol=5e-4, atol=5e-4)
    print("KERNEL_OK")
</pallas_src>

<mosaic_0001>
module attributes {stable_mosaic.version = 11 : i64} {
  func.func @kernel(%arg0: i32, %arg1: i32, %arg2: memref<8x8x1xi32, #tpu.memory_space<vmem>>, %arg3: memref<16x128xf32, #tpu.memory_space<vmem>>, %arg4: memref<32x128xf32, #tpu.memory_space<vmem>>, %arg5: memref<8x32xf32, #tpu.memory_space<vmem>>, %arg6: memref<8x32xf32, #tpu.memory_space<vmem>>, %arg7: memref<8x32xf32, #tpu.memory_space<vmem>>) attributes {dimension_semantics = [#tpu.dimension_semantics<parallel>, #tpu.dimension_semantics<arbitrary>], iteration_bounds = array<i64: 1, 1>, scalar_prefetch = 0 : i64, scratch_operands = 2 : i64, tpu.core_type = #tpu.core_type<tc>, window_params = [{transform_indices = @transform_0, window_bounds = array<i64: 8, 8, 1>}, {pipeline_mode = #tpu.pipeline_mode<synchronous>, transform_indices = @transform_1, window_bounds = array<i64: 16, 128>}, {pipeline_mode = #tpu.pipeline_mode<synchronous>, transform_indices = @transform_2, window_bounds = array<i64: 32, 128>}, {transform_indices = @transform_3, window_bounds = array<i64: 8, 32>}]} {
    %c0_i32 = arith.constant 0 : i32
    %0 = arith.cmpi eq, %arg1, %c0_i32 : i32
    %1 = arith.extui %0 : i1 to i32
    %c0_i32_0 = arith.constant 0 : i32
    %2 = arith.cmpi ne, %1, %c0_i32_0 : i32
    scf.if %2 {
      %cst_146 = arith.constant 0.000000e+00 : f32
      %362 = vector.broadcast %cst_146 : f32 to vector<8x32xf32>
      %c0_147 = arith.constant 0 : index
      %c0_148 = arith.constant 0 : index
      %363 = vector.load %arg6[%c0_147, %c0_148] : memref<8x32xf32, #tpu.memory_space<vmem>>, vector<8x32xf32>
      tpu.vector_store %arg6[%c0_147, %c0_148], %362 {strides = array<i32>} : memref<8x32xf32, #tpu.memory_space<vmem>>, vector<8x32xf32>,
      %cst_149 = arith.constant 0.000000e+00 : f32
      %364 = vector.broadcast %cst_149 : f32 to vector<8x32xf32>
      %c0_150 = arith.constant 0 : index
      %c0_151 = arith.constant 0 : index
      %365 = vector.load %arg7[%c0_150, %c0_151] : memref<8x32xf32, #tpu.memory_space<vmem>>, vector<8x32xf32>
      tpu.vector_store %arg7[%c0_150, %c0_151], %364 {strides = array<i32>} : memref<8x32xf32, #tpu.memory_space<vmem>>, vector<8x32xf32>,
    } else {
    }
    %c0 = arith.constant 0 : index
    %c0_1 = arith.constant 0 : index
    %3 = vector.load %arg6[%c0, %c0_1] : memref<8x32xf32, #tpu.memory_space<vmem>>, vector<8x32xf32>
    %c0_2 = arith.constant 0 : index
    %c0_3 = arith.constant 0 : index
    %4 = vector.load %arg7[%c0_2, %c0_3] : memref<8x32xf32, #tpu.memory_space<vmem>>, vector<8x32xf32>
    %c0_i32_4 = arith.constant 0 : i32
    %5 = arith.index_cast %c0_i32_4 : i32 to index
    %c0_5 = arith.constant 0 : index
    %c0_6 = arith.constant 0 : index
    %6 = vector.load %arg2[%5, %c0_5, %c0_6] : memref<8x8x1xi32, #tpu.memory_space<vmem>>, vector<1x8x1xi32>
    %7 = vector.shape_cast %6 : vector<1x8x1xi32> to vector<8x1xi32>
    %8 = tpu.iota {dimensions = array<i32: 1>} : vector<8x16xi32>
    %9 = vector.broadcast %7 : vector<8x1xi32> to vector<8x16xi32>
    %10 = arith.cmpi eq, %9, %8 : vector<8x16xi32>
    %11 = arith.extui %10 : vector<8x16xi1> to vector<8x16xi32>
    %12 = arith.sitofp %11 : vector<8x16xi32> to vector<8x16xf32>
    %c0_7 = arith.constant 0 : index
    %c0_8 = arith.constant 0 : index
    %13 = vector.load %arg3[%c0_7, %c0_8] : memref<16x128xf32, #tpu.memory_space<vmem>>, vector<16x128xf32>
    %cst = arith.constant dense<0.000000e+00> : vector<8x128xf32>
    %14 = tpu.matmul %12, %13, %cst {dimension_numbers = #tpu.dot_dimension_numbers<[1], [0], [0], [1], [0, 0, 1, 1], [], []>} : vector<8x16xf32>, vector<16x128xf32>, vector<8x128xf32> -> vector<8x128xf32>
    %c0_9 = arith.constant 0 : index
    %c0_10 = arith.constant 0 : index
    %15 = vector.load %arg4[%c0_9, %c0_10] : memref<32x128xf32, #tpu.memory_space<vmem>>, vector<32x128xf32>
    %cst_11 = arith.constant dense<0.000000e+00> : vector<8x128xf32>
    %16 = tpu.matmul %3, %15, %cst_11 {dimension_numbers = #tpu.dot_dimension_numbers<[1], [0], [0], [1], [0, 0, 1, 1], [], []>} : vector<8x32xf32>, vector<32x128xf32>, vector<8x128xf32> -> vector<8x128xf32>
    %17 = arith.addf %14, %16 : vector<8x128xf32>
    %18 = vector.extract_strided_slice %17 {offsets = [0, 0], sizes = [8, 32], strides = [1, 1]} : vector<8x128xf32> to vector<8x32xf32>
    %cst_12 = arith.constant 0.000000e+00 : f32
    %19 = vector.broadcast %cst_12 : f32 to vector<8x32xf32>
    %20 = arith.subf %19, %18 : vector<8x32xf32>
    %21 = math.exp %20 : vector<8x32xf32>
    %cst_13 = arith.constant 1.000000e+00 : f32
    %22 = vector.broadcast %cst_13 : f32 to vector<8x32xf32>
    %23 = arith.addf %22, %21 : vector<8x32xf32>
    %cst_14 = arith.constant 1.000000e+00 : f32
    %24 = vector.broadcast %cst_14 : f32 to vector<8x32xf32>
    %25 = arith.divf %24, %23 : vector<8x32xf32>
    %26 = vector.extract_strided_slice %17 {offsets = [0, 32], sizes = [8, 32], strides = [1, 1]} : vector<8x128xf32> to vector<8x32xf32>
    %cst_15 = arith.constant 0.000000e+00 : f32
    %27 = vector.broadcast %cst_15 : f32 to vector<8x32xf32>
    %28 = arith.subf %27, %26 : vector<8x32xf32>
    %29 = math.exp %28 : vector<8x32xf32>
    %cst_16 = arith.constant 1.000000e+00 : f32
    %30 = vector.broadcast %cst_16 : f32 to vector<8x32xf32>
    %31 = arith.addf %30, %29 : vector<8x32xf32>
    %cst_17 = arith.constant 1.000000e+00 : f32
    %32 = vector.broadcast %cst_17 : f32 to vector<8x32xf32>
    %33 = arith.divf %32, %31 : vector<8x32xf32>
    %34 = vector.extract_strided_slice %17 {offsets = [0, 64], sizes = [8, 32], strides = [1, 1]} : vector<8x128xf32> to vector<8x32xf32>
    %35 = math.tanh %34 : vector<8x32xf32>
    %36 = vector.extract_strided_slice %17 {offsets = [0, 96], sizes = [8, 32], strides = [1, 1]} : vector<8x128xf32> to vector<8x32xf32>
    %cst_18 = arith.constant 0.000000e+00 : f32
    %37 = vector.broadcast %cst_18 : f32 to vector<8x32xf32>
    %38 = arith.subf %37, %36 : vector<8x32xf32>
    %39 = math.exp %38 : vector<8x32xf32>
    %cst_19 = arith.constant 1.000000e+00 : f32
    %40 = vector.broadcast %cst_19 : f32 to vector<8x32xf32>
    %41 = arith.addf %40, %39 : vector<8x32xf32>
    %cst_20 = arith.constant 1.000000e+00 : f32
    %42 = vector.broadcast %cst_20 : f32 to vector<8x32xf32>
    %43 = arith.divf %42, %41 : vector<8x32xf32>
    %44 = arith.mulf %33, %4 : vector<8x32xf32>
    %45 = arith.mulf %25, %35 : vector<8x32xf32>
    %46 = arith.addf %44, %45 : vector<8x32xf32>
    %47 = math.tanh %46 : vector<8x32xf32>
    %48 = arith.mulf %43, %47 : vector<8x32xf32>
    %c1_i32 = arith.constant 1 : i32
    %49 = arith.index_cast %c1_i32 : i32 to index
    %c0_21 = arith.constant 0 : index
    %c0_22 = arith.constant 0 : index
    %50 = vector.load %arg2[%49, %c0_21, %c0_22] : memref<8x8x1xi32, #tpu.memory_space<vmem>>, vector<1x8x1xi32>
    %51 = vector.shape_cast %50 : vector<1x8x1xi32> to vector<8x1xi32>
    %52 = tpu.iota {dimensions = array<i32: 1>} : vector<8x16xi32>
    %53 = vector.broadcast %51 : vector<8x1xi32> to vector<8x16xi32>
    %54 = arith.cmpi eq, %53, %52 : vector<8x16xi32>
    %55 = arith.extui %54 : vector<8x16xi1> to vector<8x16xi32>
    %56 = arith.sitofp %55 : vector<8x16xi32> to vector<8x16xf32>
    %c0_23 = arith.constant 0 : index
    %c0_24 = arith.constant 0 : index
    %57 = vector.load %arg3[%c0_23, %c0_24] : memref<16x128xf32, #tpu.memory_space<vmem>>, vector<16x128xf32>
    %cst_25 = arith.constant dense<0.000000e+00> : vector<8x128xf32>
    %58 = tpu.matmul %56, %57, %cst_25 {dimension_numbers = #tpu.dot_dimension_numbers<[1], [0], [0], [1], [0, 0, 1, 1], [], []>} : vector<8x16xf32>, vector<16x128xf32>, vector<8x128xf32> -> vector<8x128xf32>
    %c0_26 = arith.constant 0 : index
    %c0_27 = arith.constant 0 : index
    %59 = vector.load %arg4[%c0_26, %c0_27] : memref<32x128xf32, #tpu.memory_space<vmem>>, vector<32x128xf32>
    %cst_28 = arith.constant dense<0.000000e+00> : vector<8x128xf32>
    %60 = tpu.matmul %48, %59, %cst_28 {dimension_numbers = #tpu.dot_dimension_numbers<[1], [0], [0], [1], [0, 0, 1, 1], [], []>} : vector<8x32xf32>, vector<32x128xf32>, vector<8x128xf32> -> vector<8x128xf32>
    %61 = arith.addf %58, %60 : vector<8x128xf32>
    %62 = vector.extract_strided_slice %61 {offsets = [0, 0], sizes = [8, 32], strides = [1, 1]} : vector<8x128xf32> to vector<8x32xf32>
    %cst_29 = arith.constant 0.000000e+00 : f32
    %63 = vector.broadcast %cst_29 : f32 to vector<8x32xf32>
    %64 = arith.subf %63, %62 : vector<8x32xf32>
    %65 = math.exp %64 : vector<8x32xf32>
    %cst_30 = arith.constant 1.000000e+00 : f32
    %66 = vector.broadcast %cst_30 : f32 to vector<8x32xf32>
    %67 = arith.addf %66, %65 : vector<8x32xf32>
    %cst_31 = arith.constant 1.000000e+00 : f32
    %68 = vector.broadcast %cst_31 : f32 to vector<8x32xf32>
    %69 = arith.divf %68, %67 : vector<8x32xf32>
    %70 = vector.extract_strided_slice %61 {offsets = [0, 32], sizes = [8, 32], strides = [1, 1]} : vector<8x128xf32> to vector<8x32xf32>
    %cst_32 = arith.constant 0.000000e+00 : f32
    %71 = vector.broadcast %cst_32 : f32 to vector<8x32xf32>
    %72 = arith.subf %71, %70 : vector<8x32xf32>
    %73 = math.exp %72 : vector<8x32xf32>
    %cst_33 = arith.constant 1.000000e+00 : f32
    %74 = vector.broadcast %cst_33 : f32 to vector<8x32xf32>
    %75 = arith.addf %74, %73 : vector<8x32xf32>
    %cst_34 = arith.constant 1.000000e+00 : f32
    %76 = vector.broadcast %cst_34 : f32 to vector<8x32xf32>
    %77 = arith.divf %76, %75 : vector<8x32xf32>
    %78 = vector.extract_strided_slice %61 {offsets = [0, 64], sizes = [8, 32], strides = [1, 1]} : vector<8x128xf32> to vector<8x32xf32>
    %79 = math.tanh %78 : vector<8x32xf32>
    %80 = vector.extract_strided_slice %61 {offsets = [0, 96], sizes = [8, 32], strides = [1, 1]} : vector<8x128xf32> to vector<8x32xf32>
    %cst_35 = arith.constant 0.000000e+00 : f32
    %81 = vector.broadcast %cst_35 : f32 to vector<8x32xf32>
    %82 = arith.subf %81, %80 : vector<8x32xf32>
    %83 = math.exp %82 : vector<8x32xf32>
    %cst_36 = arith.constant 1.000000e+00 : f32
    %84 = vector.broadcast %cst_36 : f32 to vector<8x32xf32>
    %85 = arith.addf %84, %83 : vector<8x32xf32>
    %cst_37 = arith.constant 1.000000e+00 : f32
    %86 = vector.broadcast %cst_37 : f32 to vector<8x32xf32>
    %87 = arith.divf %86, %85 : vector<8x32xf32>
    %88 = arith.mulf %77, %46 : vector<8x32xf32>
    %89 = arith.mulf %69, %79 : vector<8x32xf32>
    %90 = arith.addf %88, %89 : vector<8x32xf32>
    %91 = math.tanh %90 : vector<8x32xf32>
    %92 = arith.mulf %87, %91 : vector<8x32xf32>
    %c2_i32 = arith.constant 2 : i32
    %93 = arith.index_cast %c2_i32 : i32 to index
    %c0_38 = arith.constant 0 : index
    %c0_39 = arith.constant 0 : index
    %94 = vector.load %arg2[%93, %c0_38, %c0_39] : memref<8x8x1xi32, #tpu.memory_space<vmem>>, vector<1x8x1xi32>
    %95 = vector.shape_cast %94 : vector<1x8x1xi32> to vector<8x1xi32>
    %96 = tpu.iota {dimensions = array<i32: 1>} : vector<8x16xi32>
    %97 = vector.broadcast %95 : vector<8x1xi32> to vector<8x16xi32>
    %98 = arith.cmpi eq, %97, %96 : vector<8x16xi32>
    %99 = arith.extui %98 : vector<8x16xi1> to vector<8x16xi32>
    %100 = arith.sitofp %99 : vector<8x16xi32> to vector<8x16xf32>
    %c0_40 = arith.constant 0 : index
    %c0_41 = arith.constant 0 : index
    %101 = vector.load %arg3[%c0_40, %c0_41] : memref<16x128xf32, #tpu.memory_space<vmem>>, vector<16x128xf32>
    %cst_42 = arith.constant dense<0.000000e+00> : vector<8x128xf32>
    %102 = tpu.matmul %100, %101, %cst_42 {dimension_numbers = #tpu.dot_dimension_numbers<[1], [0], [0], [1], [0, 0, 1, 1], [], []>} : vector<8x16xf32>, vector<16x128xf32>, vector<8x128xf32> -> vector<8x128xf32>
    %c0_43 = arith.constant 0 : index
    %c0_44 = arith.constant 0 : index
    %103 = vector.load %arg4[%c0_43, %c0_44] : memref<32x128xf32, #tpu.memory_space<vmem>>, vector<32x128xf32>
    %cst_45 = arith.constant dense<0.000000e+00> : vector<8x128xf32>
    %104 = tpu.matmul %92, %103, %cst_45 {dimension_numbers = #tpu.dot_dimension_numbers<[1], [0], [0], [1], [0, 0, 1, 1], [], []>} : vector<8x32xf32>, vector<32x128xf32>, vector<8x128xf32> -> vector<8x128xf32>
    %105 = arith.addf %102, %104 : vector<8x128xf32>
    %106 = vector.extract_strided_slice %105 {offsets = [0, 0], sizes = [8, 32], strides = [1, 1]} : vector<8x128xf32> to vector<8x32xf32>
    %cst_46 = arith.constant 0.000000e+00 : f32
    %107 = vector.broadcast %cst_46 : f32 to vector<8x32xf32>
    %108 = arith.subf %107, %106 : vector<8x32xf32>
    %109 = math.exp %108 : vector<8x32xf32>
    %cst_47 = arith.constant 1.000000e+00 : f32
    %110 = vector.broadcast %cst_47 : f32 to vector<8x32xf32>
    %111 = arith.addf %110, %109 : vector<8x32xf32>
    %cst_48 = arith.constant 1.000000e+00 : f32
    %112 = vector.broadcast %cst_48 : f32 to vector<8x32xf32>
    %113 = arith.divf %112, %111 : vector<8x32xf32>
    %114 = vector.extract_strided_slice %105 {offsets = [0, 32], sizes = [8, 32], strides = [1, 1]} : vector<8x128xf32> to vector<8x32xf32>
    %cst_49 = arith.constant 0.000000e+00 : f32
    %115 = vector.broadcast %cst_49 : f32 to vector<8x32xf32>
    %116 = arith.subf %115, %114 : vector<8x32xf32>
    %117 = math.exp %116 : vector<8x32xf32>
    %cst_50 = arith.constant 1.000000e+00 : f32
    %118 = vector.broadcast %cst_50 : f32 to vector<8x32xf32>
    %119 = arith.addf %118, %117 : vector<8x32xf32>
    %cst_51 = arith.constant 1.000000e+00 : f32
    %120 = vector.broadcast %cst_51 : f32 to vector<8x32xf32>
    %121 = arith.divf %120, %119 : vector<8x32xf32>
    %122 = vector.extract_strided_slice %105 {offsets = [0, 64], sizes = [8, 32], strides = [1, 1]} : vector<8x128xf32> to vector<8x32xf32>
    %123 = math.tanh %122 : vector<8x32xf32>
    %124 = vector.extract_strided_slice %105 {offsets = [0, 96], sizes = [8, 32], strides = [1, 1]} : vector<8x128xf32> to vector<8x32xf32>
    %cst_52 = arith.constant 0.000000e+00 : f32
    %125 = vector.broadcast %cst_52 : f32 to vector<8x32xf32>
    %126 = arith.subf %125, %124 : vector<8x32xf32>
    %127 = math.exp %126 : vector<8x32xf32>
    %cst_53 = arith.constant 1.000000e+00 : f32
    %128 = vector.broadcast %cst_53 : f32 to vector<8x32xf32>
    %129 = arith.addf %128, %127 : vector<8x32xf32>
    %cst_54 = arith.constant 1.000000e+00 : f32
    %130 = vector.broadcast %cst_54 : f32 to vector<8x32xf32>
    %131 = arith.divf %130, %129 : vector<8x32xf32>
    %132 = arith.mulf %121, %90 : vector<8x32xf32>
    %133 = arith.mulf %113, %123 : vector<8x32xf32>
    %134 = arith.addf %132, %133 : vector<8x32xf32>
    %135 = math.tanh %134 : vector<8x32xf32>
    %136 = arith.mulf %131, %135 : vector<8x32xf32>
    %c3_i32 = arith.constant 3 : i32
    %137 = arith.index_cast %c3_i32 : i32 to index
    %c0_55 = arith.constant 0 : index
    %c0_56 = arith.constant 0 : index
    %138 = vector.load %arg2[%137, %c0_55, %c0_56] : memref<8x8x1xi32, #tpu.memory_space<vmem>>, vector<1x8x1xi32>
    %139 = vector.shape_cast %138 : vector<1x8x1xi32> to vector<8x1xi32>
    %140 = tpu.iota {dimensions = array<i32: 1>} : vector<8x16xi32>
    %141 = vector.broadcast %139 : vector<8x1xi32> to vector<8x16xi32>
    %142 = arith.cmpi eq, %141, %140 : vector<8x16xi32>
    %143 = arith.extui %142 : vector<8x16xi1> to vector<8x16xi32>
    %144 = arith.sitofp %143 : vector<8x16xi32> to vector<8x16xf32>
    %c0_57 = arith.constant 0 : index
    %c0_58 = arith.constant 0 : index
    %145 = vector.load %arg3[%c0_57, %c0_58] : memref<16x128xf32, #tpu.memory_space<vmem>>, vector<16x128xf32>
    %cst_59 = arith.constant dense<0.000000e+00> : vector<8x128xf32>
    %146 = tpu.matmul %144, %145, %cst_59 {dimension_numbers = #tpu.dot_dimension_numbers<[1], [0], [0], [1], [0, 0, 1, 1], [], []>} : vector<8x16xf32>, vector<16x128xf32>, vector<8x128xf32> -> vector<8x128xf32>
    %c0_60 = arith.constant 0 : index
    %c0_61 = arith.constant 0 : index
    %147 = vector.load %arg4[%c0_60, %c0_61] : memref<32x128xf32, #tpu.memory_space<vmem>>, vector<32x128xf32>
    %cst_62 = arith.constant dense<0.000000e+00> : vector<8x128xf32>
    %148 = tpu.matmul %136, %147, %cst_62 {dimension_numbers = #tpu.dot_dimension_numbers<[1], [0], [0], [1], [0, 0, 1, 1], [], []>} : vector<8x32xf32>, vector<32x128xf32>, vector<8x128xf32> -> vector<8x128xf32>
    %149 = arith.addf %146, %148 : vector<8x128xf32>
    %150 = vector.extract_strided_slice %149 {offsets = [0, 0], sizes = [8, 32], strides = [1, 1]} : vector<8x128xf32> to vector<8x32xf32>
    %cst_63 = arith.constant 0.000000e+00 : f32
    %151 = vector.broadcast %cst_63 : f32 to vector<8x32xf32>
    %152 = arith.subf %151, %150 : vector<8x32xf32>
    %153 = math.exp %152 : vector<8x32xf32>
    %cst_64 = arith.constant 1.000000e+00 : f32
    %154 = vector.broadcast %cst_64 : f32 to vector<8x32xf32>
    %155 = arith.addf %154, %153 : vector<8x32xf32>
    %cst_65 = arith.constant 1.000000e+00 : f32
    %156 = vector.broadcast %cst_65 : f32 to vector<8x32xf32>
    %157 = arith.divf %156, %155 : vector<8x32xf32>
    %158 = vector.extract_strided_slice %149 {offsets = [0, 32], sizes = [8, 32], strides = [1, 1]} : vector<8x128xf32> to vector<8x32xf32>
    %cst_66 = arith.constant 0.000000e+00 : f32
    %159 = vector.broadcast %cst_66 : f32 to vector<8x32xf32>
    %160 = arith.subf %159, %158 : vector<8x32xf32>
    %161 = math.exp %160 : vector<8x32xf32>
    %cst_67 = arith.constant 1.000000e+00 : f32
    %162 = vector.broadcast %cst_67 : f32 to vector<8x32xf32>
    %163 = arith.addf %162, %161 : vector<8x32xf32>
    %cst_68 = arith.constant 1.000000e+00 : f32
    %164 = vector.broadcast %cst_68 : f32 to vector<8x32xf32>
    %165 = arith.divf %164, %163 : vector<8x32xf32>
    %166 = vector.extract_strided_slice %149 {offsets = [0, 64], sizes = [8, 32], strides = [1, 1]} : vector<8x128xf32> to vector<8x32xf32>
    %167 = math.tanh %166 : vector<8x32xf32>
    %168 = vector.extract_strided_slice %149 {offsets = [0, 96], sizes = [8, 32], strides = [1, 1]} : vector<8x128xf32> to vector<8x32xf32>
    %cst_69 = arith.constant 0.000000e+00 : f32
    %169 = vector.broadcast %cst_69 : f32 to vector<8x32xf32>
    %170 = arith.subf %169, %168 : vector<8x32xf32>
    %171 = math.exp %170 : vector<8x32xf32>
    %cst_70 = arith.constant 1.000000e+00 : f32
    %172 = vector.broadcast %cst_70 : f32 to vector<8x32xf32>
    %173 = arith.addf %172, %171 : vector<8x32xf32>
    %cst_71 = arith.constant 1.000000e+00 : f32
    %174 = vector.broadcast %cst_71 : f32 to vector<8x32xf32>
    %175 = arith.divf %174, %173 : vector<8x32xf32>
    %176 = arith.mulf %165, %134 : vector<8x32xf32>
    %177 = arith.mulf %157, %167 : vector<8x32xf32>
    %178 = arith.addf %176, %177 : vector<8x32xf32>
    %179 = math.tanh %178 : vector<8x32xf32>
    %180 = arith.mulf %175, %179 : vector<8x32xf32>
    %c4_i32 = arith.constant 4 : i32
    %181 = arith.index_cast %c4_i32 : i32 to index
    %c0_72 = arith.constant 0 : index
    %c0_73 = arith.constant 0 : index
    %182 = vector.load %arg2[%181, %c0_72, %c0_73] : memref<8x8x1xi32, #tpu.memory_space<vmem>>, vector<1x8x1xi32>
    %183 = vector.shape_cast %182 : vector<1x8x1xi32> to vector<8x1xi32>
    %184 = tpu.iota {dimensions = array<i32: 1>} : vector<8x16xi32>
    %185 = vector.broadcast %183 : vector<8x1xi32> to vector<8x16xi32>
    %186 = arith.cmpi eq, %185, %184 : vector<8x16xi32>
    %187 = arith.extui %186 : vector<8x16xi1> to vector<8x16xi32>
    %188 = arith.sitofp %187 : vector<8x16xi32> to vector<8x16xf32>
    %c0_74 = arith.constant 0 : index
    %c0_75 = arith.constant 0 : index
    %189 = vector.load %arg3[%c0_74, %c0_75] : memref<16x128xf32, #tpu.memory_space<vmem>>, vector<16x128xf32>
    %cst_76 = arith.constant dense<0.000000e+00> : vector<8x128xf32>
    %190 = tpu.matmul %188, %189, %cst_76 {dimension_numbers = #tpu.dot_dimension_numbers<[1], [0], [0], [1], [0, 0, 1, 1], [], []>} : vector<8x16xf32>, vector<16x128xf32>, vector<8x128xf32> -> vector<8x128xf32>
    %c0_77 = arith.constant 0 : index
    %c0_78 = arith.constant 0 : index
    %191 = vector.load %arg4[%c0_77, %c0_78] : memref<32x128xf32, #tpu.memory_space<vmem>>, vector<32x128xf32>
    %cst_79 = arith.constant dense<0.000000e+00> : vector<8x128xf32>
    %192 = tpu.matmul %180, %191, %cst_79 {dimension_numbers = #tpu.dot_dimension_numbers<[1], [0], [0], [1], [0, 0, 1, 1], [], []>} : vector<8x32xf32>, vector<32x128xf32>, vector<8x128xf32> -> vector<8x128xf32>
    %193 = arith.addf %190, %192 : vector<8x128xf32>
    %194 = vector.extract_strided_slice %193 {offsets = [0, 0], sizes = [8, 32], strides = [1, 1]} : vector<8x128xf32> to vector<8x32xf32>
    %cst_80 = arith.constant 0.000000e+00 : f32
    %195 = vector.broadcast %cst_80 : f32 to vector<8x32xf32>
    %196 = arith.subf %195, %194 : vector<8x32xf32>
    %197 = math.exp %196 : vector<8x32xf32>
    %cst_81 = arith.constant 1.000000e+00 : f32
    %198 = vector.broadcast %cst_81 : f32 to vector<8x32xf32>
    %199 = arith.addf %198, %197 : vector<8x32xf32>
    %cst_82 = arith.constant 1.000000e+00 : f32
    %200 = vector.broadcast %cst_82 : f32 to vector<8x32xf32>
    %201 = arith.divf %200, %199 : vector<8x32xf32>
    %202 = vector.extract_strided_slice %193 {offsets = [0, 32], sizes = [8, 32], strides = [1, 1]} : vector<8x128xf32> to vector<8x32xf32>
    %cst_83 = arith.constant 0.000000e+00 : f32
    %203 = vector.broadcast %cst_83 : f32 to vector<8x32xf32>
    %204 = arith.subf %203, %202 : vector<8x32xf32>
    %205 = math.exp %204 : vector<8x32xf32>
    %cst_84 = arith.constant 1.000000e+00 : f32
    %206 = vector.broadcast %cst_84 : f32 to vector<8x32xf32>
    %207 = arith.addf %206, %205 : vector<8x32xf32>
    %cst_85 = arith.constant 1.000000e+00 : f32
    %208 = vector.broadcast %cst_85 : f32 to vector<8x32xf32>
    %209 = arith.divf %208, %207 : vector<8x32xf32>
    %210 = vector.extract_strided_slice %193 {offsets = [0, 64], sizes = [8, 32], strides = [1, 1]} : vector<8x128xf32> to vector<8x32xf32>
    %211 = math.tanh %210 : vector<8x32xf32>
    %212 = vector.extract_strided_slice %193 {offsets = [0, 96], sizes = [8, 32], strides = [1, 1]} : vector<8x128xf32> to vector<8x32xf32>
    %cst_86 = arith.constant 0.000000e+00 : f32
    %213 = vector.broadcast %cst_86 : f32 to vector<8x32xf32>
    %214 = arith.subf %213, %212 : vector<8x32xf32>
    %215 = math.exp %214 : vector<8x32xf32>
    %cst_87 = arith.constant 1.000000e+00 : f32
    %216 = vector.broadcast %cst_87 : f32 to vector<8x32xf32>
    %217 = arith.addf %216, %215 : vector<8x32xf32>
    %cst_88 = arith.constant 1.000000e+00 : f32
    %218 = vector.broadcast %cst_88 : f32 to vector<8x32xf32>
    %219 = arith.divf %218, %217 : vector<8x32xf32>
    %220 = arith.mulf %209, %178 : vector<8x32xf32>
    %221 = arith.mulf %201, %211 : vector<8x32xf32>
    %222 = arith.addf %220, %221 : vector<8x32xf32>
    %223 = math.tanh %222 : vector<8x32xf32>
    %224 = arith.mulf %219, %223 : vector<8x32xf32>
    %c5_i32 = arith.constant 5 : i32
    %225 = arith.index_cast %c5_i32 : i32 to index
    %c0_89 = arith.constant 0 : index
    %c0_90 = arith.constant 0 : index
    %226 = vector.load %arg2[%225, %c0_89, %c0_90] : memref<8x8x1xi32, #tpu.memory_space<vmem>>, vector<1x8x1xi32>
    %227 = vector.shape_cast %226 : vector<1x8x1xi32> to vector<8x1xi32>
    %228 = tpu.iota {dimensions = array<i32: 1>} : vector<8x16xi32>
    %229 = vector.broadcast %227 : vector<8x1xi32> to vector<8x16xi32>
    %230 = arith.cmpi eq, %229, %228 : vector<8x16xi32>
    %231 = arith.extui %230 : vector<8x16xi1> to vector<8x16xi32>
    %232 = arith.sitofp %231 : vector<8x16xi32> to vector<8x16xf32>
    %c0_91 = arith.constant 0 : index
    %c0_92 = arith.constant 0 : index
    %233 = vector.load %arg3[%c0_91, %c0_92] : memref<16x128xf32, #tpu.memory_space<vmem>>, vector<16x128xf32>
    %cst_93 = arith.constant dense<0.000000e+00> : vector<8x128xf32>
    %234 = tpu.matmul %232, %233, %cst_93 {dimension_numbers = #tpu.dot_dimension_numbers<[1], [0], [0], [1], [0, 0, 1, 1], [], []>} : vector<8x16xf32>, vector<16x128xf32>, vector<8x128xf32> -> vector<8x128xf32>
    %c0_94 = arith.constant 0 : index
    %c0_95 = arith.constant 0 : index
    %235 = vector.load %arg4[%c0_94, %c0_95] : memref<32x128xf32, #tpu.memory_space<vmem>>, vector<32x128xf32>
    %cst_96 = arith.constant dense<0.000000e+00> : vector<8x128xf32>
    %236 = tpu.matmul %224, %235, %cst_96 {dimension_numbers = #tpu.dot_dimension_numbers<[1], [0], [0], [1], [0, 0, 1, 1], [], []>} : vector<8x32xf32>, vector<32x128xf32>, vector<8x128xf32> -> vector<8x128xf32>
    %237 = arith.addf %234, %236 : vector<8x128xf32>
    %238 = vector.extract_strided_slice %237 {offsets = [0, 0], sizes = [8, 32], strides = [1, 1]} : vector<8x128xf32> to vector<8x32xf32>
    %cst_97 = arith.constant 0.000000e+00 : f32
    %239 = vector.broadcast %cst_97 : f32 to vector<8x32xf32>
    %240 = arith.subf %239, %238 : vector<8x32xf32>
    %241 = math.exp %240 : vector<8x32xf32>
    %cst_98 = arith.constant 1.000000e+00 : f32
    %242 = vector.broadcast %cst_98 : f32 to vector<8x32xf32>
    %243 = arith.addf %242, %241 : vector<8x32xf32>
    %cst_99 = arith.constant 1.000000e+00 : f32
    %244 = vector.broadcast %cst_99 : f32 to vector<8x32xf32>
    %245 = arith.divf %244, %243 : vector<8x32xf32>
    %246 = vector.extract_strided_slice %237 {offsets = [0, 32], sizes = [8, 32], strides = [1, 1]} : vector<8x128xf32> to vector<8x32xf32>
    %cst_100 = arith.constant 0.000000e+00 : f32
    %247 = vector.broadcast %cst_100 : f32 to vector<8x32xf32>
    %248 = arith.subf %247, %246 : vector<8x32xf32>
    %249 = math.exp %248 : vector<8x32xf32>
    %cst_101 = arith.constant 1.000000e+00 : f32
    %250 = vector.broadcast %cst_101 : f32 to vector<8x32xf32>
    %251 = arith.addf %250, %249 : vector<8x32xf32>
    %cst_102 = arith.constant 1.000000e+00 : f32
    %252 = vector.broadcast %cst_102 : f32 to vector<8x32xf32>
    %253 = arith.divf %252, %251 : vector<8x32xf32>
    %254 = vector.extract_strided_slice %237 {offsets = [0, 64], sizes = [8, 32], strides = [1, 1]} : vector<8x128xf32> to vector<8x32xf32>
    %255 = math.tanh %254 : vector<8x32xf32>
    %256 = vector.extract_strided_slice %237 {offsets = [0, 96], sizes = [8, 32], strides = [1, 1]} : vector<8x128xf32> to vector<8x32xf32>
    %cst_103 = arith.constant 0.000000e+00 : f32
    %257 = vector.broadcast %cst_103 : f32 to vector<8x32xf32>
    %258 = arith.subf %257, %256 : vector<8x32xf32>
    %259 = math.exp %258 : vector<8x32xf32>
    %cst_104 = arith.constant 1.000000e+00 : f32
    %260 = vector.broadcast %cst_104 : f32 to vector<8x32xf32>
    %261 = arith.addf %260, %259 : vector<8x32xf32>
    %cst_105 = arith.constant 1.000000e+00 : f32
    %262 = vector.broadcast %cst_105 : f32 to vector<8x32xf32>
    %263 = arith.divf %262, %261 : vector<8x32xf32>
    %264 = arith.mulf %253, %222 : vector<8x32xf32>
    %265 = arith.mulf %245, %255 : vector<8x32xf32>
    %266 = arith.addf %264, %265 : vector<8x32xf32>
    %267 = math.tanh %266 : vector<8x32xf32>
    %268 = arith.mulf %263, %267 : vector<8x32xf32>
    %c6_i32 = arith.constant 6 : i32
    %269 = arith.index_cast %c6_i32 : i32 to index
    %c0_106 = arith.constant 0 : index
    %c0_107 = arith.constant 0 : index
    %270 = vector.load %arg2[%269, %c0_106, %c0_107] : memref<8x8x1xi32, #tpu.memory_space<vmem>>, vector<1x8x1xi32>
    %271 = vector.shape_cast %270 : vector<1x8x1xi32> to vector<8x1xi32>
    %272 = tpu.iota {dimensions = array<i32: 1>} : vector<8x16xi32>
    %273 = vector.broadcast %271 : vector<8x1xi32> to vector<8x16xi32>
    %274 = arith.cmpi eq, %273, %272 : vector<8x16xi32>
    %275 = arith.extui %274 : vector<8x16xi1> to vector<8x16xi32>
    %276 = arith.sitofp %275 : vector<8x16xi32> to vector<8x16xf32>
    %c0_108 = arith.constant 0 : index
    %c0_109 = arith.constant 0 : index
    %277 = vector.load %arg3[%c0_108, %c0_109] : memref<16x128xf32, #tpu.memory_space<vmem>>, vector<16x128xf32>
    %cst_110 = arith.constant dense<0.000000e+00> : vector<8x128xf32>
    %278 = tpu.matmul %276, %277, %cst_110 {dimension_numbers = #tpu.dot_dimension_numbers<[1], [0], [0], [1], [0, 0, 1, 1], [], []>} : vector<8x16xf32>, vector<16x128xf32>, vector<8x128xf32> -> vector<8x128xf32>
    %c0_111 = arith.constant 0 : index
    %c0_112 = arith.constant 0 : index
    %279 = vector.load %arg4[%c0_111, %c0_112] : memref<32x128xf32, #tpu.memory_space<vmem>>, vector<32x128xf32>
    %cst_113 = arith.constant dense<0.000000e+00> : vector<8x128xf32>
    %280 = tpu.matmul %268, %279, %cst_113 {dimension_numbers = #tpu.dot_dimension_numbers<[1], [0], [0], [1], [0, 0, 1, 1], [], []>} : vector<8x32xf32>, vector<32x128xf32>, vector<8x128xf32> -> vector<8x128xf32>
    %281 = arith.addf %278, %280 : vector<8x128xf32>
    %282 = vector.extract_strided_slice %281 {offsets = [0, 0], sizes = [8, 32], strides = [1, 1]} : vector<8x128xf32> to vector<8x32xf32>
    %cst_114 = arith.constant 0.000000e+00 : f32
    %283 = vector.broadcast %cst_114 : f32 to vector<8x32xf32>
    %284 = arith.subf %283, %282 : vector<8x32xf32>
    %285 = math.exp %284 : vector<8x32xf32>
    %cst_115 = arith.constant 1.000000e+00 : f32
    %286 = vector.broadcast %cst_115 : f32 to vector<8x32xf32>
    %287 = arith.addf %286, %285 : vector<8x32xf32>
    %cst_116 = arith.constant 1.000000e+00 : f32
    %288 = vector.broadcast %cst_116 : f32 to vector<8x32xf32>
    %289 = arith.divf %288, %287 : vector<8x32xf32>
    %290 = vector.extract_strided_slice %281 {offsets = [0, 32], sizes = [8, 32], strides = [1, 1]} : vector<8x128xf32> to vector<8x32xf32>
    %cst_117 = arith.constant 0.000000e+00 : f32
    %291 = vector.broadcast %cst_117 : f32 to vector<8x32xf32>
    %292 = arith.subf %291, %290 : vector<8x32xf32>
    %293 = math.exp %292 : vector<8x32xf32>
    %cst_118 = arith.constant 1.000000e+00 : f32
    %294 = vector.broadcast %cst_118 : f32 to vector<8x32xf32>
    %295 = arith.addf %294, %293 : vector<8x32xf32>
    %cst_119 = arith.constant 1.000000e+00 : f32
    %296 = vector.broadcast %cst_119 : f32 to vector<8x32xf32>
    %297 = arith.divf %296, %295 : vector<8x32xf32>
    %298 = vector.extract_strided_slice %281 {offsets = [0, 64], sizes = [8, 32], strides = [1, 1]} : vector<8x128xf32> to vector<8x32xf32>
    %299 = math.tanh %298 : vector<8x32xf32>
    %300 = vector.extract_strided_slice %281 {offsets = [0, 96], sizes = [8, 32], strides = [1, 1]} : vector<8x128xf32> to vector<8x32xf32>
    %cst_120 = arith.constant 0.000000e+00 : f32
    %301 = vector.broadcast %cst_120 : f32 to vector<8x32xf32>
    %302 = arith.subf %301, %300 : vector<8x32xf32>
    %303 = math.exp %302 : vector<8x32xf32>
    %cst_121 = arith.constant 1.000000e+00 : f32
    %304 = vector.broadcast %cst_121 : f32 to vector<8x32xf32>
    %305 = arith.addf %304, %303 : vector<8x32xf32>
    %cst_122 = arith.constant 1.000000e+00 : f32
    %306 = vector.broadcast %cst_122 : f32 to vector<8x32xf32>
    %307 = arith.divf %306, %305 : vector<8x32xf32>
    %308 = arith.mulf %297, %266 : vector<8x32xf32>
    %309 = arith.mulf %289, %299 : vector<8x32xf32>
    %310 = arith.addf %308, %309 : vector<8x32xf32>
    %311 = math.tanh %310 : vector<8x32xf32>
    %312 = arith.mulf %307, %311 : vector<8x32xf32>
    %c7_i32 = arith.constant 7 : i32
    %313 = arith.index_cast %c7_i32 : i32 to index
    %c0_123 = arith.constant 0 : index
    %c0_124 = arith.constant 0 : index
    %314 = vector.load %arg2[%313, %c0_123, %c0_124] : memref<8x8x1xi32, #tpu.memory_space<vmem>>, vector<1x8x1xi32>
    %315 = vector.shape_cast %314 : vector<1x8x1xi32> to vector<8x1xi32>
    %316 = tpu.iota {dimensions = array<i32: 1>} : vector<8x16xi32>
    %317 = vector.broadcast %315 : vector<8x1xi32> to vector<8x16xi32>
    %318 = arith.cmpi eq, %317, %316 : vector<8x16xi32>
    %319 = arith.extui %318 : vector<8x16xi1> to vector<8x16xi32>
    %320 = arith.sitofp %319 : vector<8x16xi32> to vector<8x16xf32>
    %c0_125 = arith.constant 0 : index
    %c0_126 = arith.constant 0 : index
    %321 = vector.load %arg3[%c0_125, %c0_126] : memref<16x128xf32, #tpu.memory_space<vmem>>, vector<16x128xf32>
    %cst_127 = arith.constant dense<0.000000e+00> : vector<8x128xf32>
    %322 = tpu.matmul %320, %321, %cst_127 {dimension_numbers = #tpu.dot_dimension_numbers<[1], [0], [0], [1], [0, 0, 1, 1], [], []>} : vector<8x16xf32>, vector<16x128xf32>, vector<8x128xf32> -> vector<8x128xf32>
    %c0_128 = arith.constant 0 : index
    %c0_129 = arith.constant 0 : index
    %323 = vector.load %arg4[%c0_128, %c0_129] : memref<32x128xf32, #tpu.memory_space<vmem>>, vector<32x128xf32>
    %cst_130 = arith.constant dense<0.000000e+00> : vector<8x128xf32>
    %324 = tpu.matmul %312, %323, %cst_130 {dimension_numbers = #tpu.dot_dimension_numbers<[1], [0], [0], [1], [0, 0, 1, 1], [], []>} : vector<8x32xf32>, vector<32x128xf32>, vector<8x128xf32> -> vector<8x128xf32>
    %325 = arith.addf %322, %324 : vector<8x128xf32>
    %326 = vector.extract_strided_slice %325 {offsets = [0, 0], sizes = [8, 32], strides = [1, 1]} : vector<8x128xf32> to vector<8x32xf32>
    %cst_131 = arith.constant 0.000000e+00 : f32
    %327 = vector.broadcast %cst_131 : f32 to vector<8x32xf32>
    %328 = arith.subf %327, %326 : vector<8x32xf32>
    %329 = math.exp %328 : vector<8x32xf32>
    %cst_132 = arith.constant 1.000000e+00 : f32
    %330 = vector.broadcast %cst_132 : f32 to vector<8x32xf32>
    %331 = arith.addf %330, %329 : vector<8x32xf32>
    %cst_133 = arith.constant 1.000000e+00 : f32
    %332 = vector.broadcast %cst_133 : f32 to vector<8x32xf32>
    %333 = arith.divf %332, %331 : vector<8x32xf32>
    %334 = vector.extract_strided_slice %325 {offsets = [0, 32], sizes = [8, 32], strides = [1, 1]} : vector<8x128xf32> to vector<8x32xf32>
    %cst_134 = arith.constant 0.000000e+00 : f32
    %335 = vector.broadcast %cst_134 : f32 to vector<8x32xf32>
    %336 = arith.subf %335, %334 : vector<8x32xf32>
    %337 = math.exp %336 : vector<8x32xf32>
    %cst_135 = arith.constant 1.000000e+00 : f32
    %338 = vector.broadcast %cst_135 : f32 to vector<8x32xf32>
    %339 = arith.addf %338, %337 : vector<8x32xf32>
    %cst_136 = arith.constant 1.000000e+00 : f32
    %340 = vector.broadcast %cst_136 : f32 to vector<8x32xf32>
    %341 = arith.divf %340, %339 : vector<8x32xf32>
    %342 = vector.extract_strided_slice %325 {offsets = [0, 64], sizes = [8, 32], strides = [1, 1]} : vector<8x128xf32> to vector<8x32xf32>
    %343 = math.tanh %342 : vector<8x32xf32>
    %344 = vector.extract_strided_slice %325 {offsets = [0, 96], sizes = [8, 32], strides = [1, 1]} : vector<8x128xf32> to vector<8x32xf32>
    %cst_137 = arith.constant 0.000000e+00 : f32
    %345 = vector.broadcast %cst_137 : f32 to vector<8x32xf32>
    %346 = arith.subf %345, %344 : vector<8x32xf32>
    %347 = math.exp %346 : vector<8x32xf32>
    %cst_138 = arith.constant 1.000000e+00 : f32
    %348 = vector.broadcast %cst_138 : f32 to vector<8x32xf32>
    %349 = arith.addf %348, %347 : vector<8x32xf32>
    %cst_139 = arith.constant 1.000000e+00 : f32
    %350 = vector.broadcast %cst_139 : f32 to vector<8x32xf32>
    %351 = arith.divf %350, %349 : vector<8x32xf32>
    %352 = arith.mulf %341, %310 : vector<8x32xf32>
    %353 = arith.mulf %333, %343 : vector<8x32xf32>
    %354 = arith.addf %352, %353 : vector<8x32xf32>
    %355 = math.tanh %354 : vector<8x32xf32>
    %356 = arith.mulf %351, %355 : vector<8x32xf32>
    %c8_i32 = arith.constant 8 : i32
    %c0_140 = arith.constant 0 : index
    %c0_141 = arith.constant 0 : index
    %357 = vector.load %arg6[%c0_140, %c0_141] : memref<8x32xf32, #tpu.memory_space<vmem>>, vector<8x32xf32>
    tpu.vector_store %arg6[%c0_140, %c0_141], %356 {strides = array<i32>} : memref<8x32xf32, #tpu.memory_space<vmem>>, vector<8x32xf32>,
    %c0_142 = arith.constant 0 : index
    %c0_143 = arith.constant 0 : index
    %358 = vector.load %arg7[%c0_142, %c0_143] : memref<8x32xf32, #tpu.memory_space<vmem>>, vector<8x32xf32>
    tpu.vector_store %arg7[%c0_142, %c0_143], %354 {strides = array<i32>} : memref<8x32xf32, #tpu.memory_space<vmem>>, vector<8x32xf32>,
    %c0_i32_144 = arith.constant 0 : i32
    %359 = arith.cmpi eq, %arg1, %c0_i32_144 : i32
    %360 = arith.extui %359 : i1 to i32
    %c0_i32_145 = arith.constant 0 : i32
    %361 = arith.cmpi ne, %360, %c0_i32_145 : i32
    scf.if %361 {
      %c0_146 = arith.constant 0 : index
      %c0_147 = arith.constant 0 : index
      %362 = vector.load %arg6[%c0_146, %c0_147] : memref<8x32xf32, #tpu.memory_space<vmem>>, vector<8x32xf32>
      %c0_148 = arith.constant 0 : index
      %c0_149 = arith.constant 0 : index
      %363 = vector.load %arg5[%c0_148, %c0_149] : memref<8x32xf32, #tpu.memory_space<vmem>>, vector<8x32xf32>
      tpu.vector_store %arg5[%c0_148, %c0_149], %362 {strides = array<i32>} : memref<8x32xf32, #tpu.memory_space<vmem>>, vector<8x32xf32>,
    } else {
    }
    return
  }
  func.func @transform_0(%arg0: i32, %arg1: i32) -> (i32, i32, i32) {
    %c0_i32 = arith.constant 0 : i32
    %c0_i32_0 = arith.constant 0 : i32
    return %arg1, %arg0, %c0_i32 : i32, i32, i32
  }
  func.func @transform_1(%arg0: i32, %arg1: i32) -> (i32, i32) {
    %c0_i32 = arith.constant 0 : i32
    %c0_i32_0 = arith.constant 0 : i32
    %c0_i32_1 = arith.constant 0 : i32
    return %c0_i32, %c0_i32_0 : i32, i32
  }
  func.func @transform_2(%arg0: i32, %arg1: i32) -> (i32, i32) {
    %c0_i32 = arith.constant 0 : i32
    %c0_i32_0 = arith.constant 0 : i32
    %c0_i32_1 = arith.constant 0 : i32
    return %c0_i32, %c0_i32_0 : i32, i32
  }
  func.func @transform_3(%arg0: i32, %arg1: i32) -> (i32, i32) {
    %c0_i32 = arith.constant 0 : i32
    %c0_i32_0 = arith.constant 0 : i32
    return %arg0, %c0_i32 : i32, i32
  }
}

</mosaic_0001>

<llo_original>
// kernel: tpu_custom_call.1
$region0: #{tpu_custom_call.1}
  #allocation0 [shape = 'u32[]', space=smem, size = 0x4, offset = 0x4, fixed_abs, tag = 'smem constant byte address 0x4 - core index']
  #allocation1 [shape = 'u32[144,128]{1,0:T(1,128)}', space=vmem, size = 0x12000, scoped, tag = 'internal scratch']
  #allocation2 [shape = 'f32[8,32]{1,0:T(8,128)}', space=vmem, size = 0x1000, scoped, tag = 'scratch operand']
  #allocation3 [shape = 'f32[8,32]{1,0:T(8,128)}', space=vmem, size = 0x1000, scoped, tag = 'scratch operand']
  %s0 = inlined_call_operand.vmem [shape: s32[8,8,1], index: 0, kind: input, shape index: {}]
  %s1 = inlined_call_operand.vmem [shape: f32[16,128], index: 1, kind: input, shape index: {}]
  %s2 = inlined_call_operand.vmem [shape: f32[32,128], index: 2, kind: input, shape index: {}]
  %s3 = inlined_call_operand.hbm [shape: f32[8,32], index: 3, kind: output, shape index: {}]
  %s4 = sld [smem:[#allocation0]]
  $region30: #{tpu_custom_call.1} parent=0
    _
  %s6 = ssub.s32 1, %s4
  %s7 = scalar_select 0, %s6, %s4
  $region1: #{tpu_custom_call.1} parent=0
    #allocation4 [shape = 'u8[4096]{0}', space=vmem, size = 0x1000, scoped, tag = 'output window, operand 0, single buffered']
    #allocation5 [shape = 's32[1]{0}', space=sflag, size = 0x4, scoped, tag = 'scoped memory for tpu_custom_call.1']
    %8 = vsyncpa [#allocation5], 0
    // Predicated region
    $region2: #{tpu_custom_call.1} parent=1 // pred_check
      _
    $region3: #{tpu_custom_call.1} parent=1 // pred_check_branch
      %10 = sbr.rel (0) target = $region5
    $region4: #{tpu_custom_call.1} parent=1 // pred_region
      _
    $region5: #{tpu_custom_call.1} parent=1 // pred_fallthru
      _
    // Predicated region
    $region6: #{tpu_custom_call.1} parent=1 // pred_check
      _
    $region7: #{tpu_custom_call.1} parent=1 // pred_check_branch
      %12 = sbr.rel (0) target = $region9
    $region8: #{tpu_custom_call.1} parent=1 // pred_region
      _
    $region9: #{tpu_custom_call.1} parent=1 // pred_fallthru
      _
    // Predicated region
    $region10: #{tpu_custom_call.1} parent=1 // pred_check
      _
    $region11: #{tpu_custom_call.1} parent=1 // pred_check_branch
      %14 = sbr.rel (0) target = $region13
    $region12: #{tpu_custom_call.1} parent=1 // pred_region
      _
    $region13: #{tpu_custom_call.1} parent=1 // pred_fallthru
      _
    %p15 = scmp.eq.s32.totalorder 0, 0
    // Predicated region
    $region14: #{tpu_custom_call.1} parent=1 // pred_check
      %p16 = pneg %p15
    $region15: #{tpu_custom_call.1} parent=1 // pred_check_branch
      %18 = sbr.rel (%p16) target = $region17
    $region16: #{tpu_custom_call.1} parent=1 // pred_region
      %vm19 = vcmask 261120
      %20 = vst.msk [vmem:[#allocation2] sm:$0xff] %vm19, 0.0
      %21 = vst.msk [vmem:[#allocation3] sm:$0xff] %vm19, 0.0
    $region17: #{tpu_custom_call.1} parent=1 // pred_fallthru
      _
    %v22 = vld [vmem:[#allocation2] sm:$0xff]
    %v23 = vld [vmem:[#allocation3] sm:$0xff]
    %v24 = vld [vmem:[%s0] sm:$0xff]
    %v25 = vlaneseq
    %v26 = vand.u32 %v25, 127
    %27 = vset.pattern.permute.xlu0 0
    %28 = vperm.xlu0 %27, %v24
    %v29 = vpop.permute.xlu0 %28
    %vm30 = vcmp.eq.s32.totalorder %v29, %v26
    %v31 = vsel %vm30, 1, 0
    %v32 = vcvt.s32.f32 %v31
    %v33 = vld [vmem:[%s1] sm:$0xff]
    %v34 = vld [vmem:[%s1 + $0x8] sm:$0xff]
    %v35 = vld [vmem:[%s2] sm:$0xff]
    %v36 = vld [vmem:[%s2 + $0x8] sm:$0xff]
    %v37 = vld [vmem:[%s2 + $0x10] sm:$0xff]
    %v38 = vld [vmem:[%s2 + $0x18] sm:$0xff]
    %vm39 = vcmask 261120
    %v41 = vsel %vm39, %v22, 0
    %43 = vmatprep.subr.mxu0 0.0
    %44 = vmatpush1.msra.mxu0 %v35
    %45 = vmatprep.subr.mxu0 0.0
    %46 = vmatpush1.msra.mxu0 %v36
    %47 = vmatprep.subr.mxu0 0.0
    %48 = vmatpush1.msra.mxu0 %v37
    %49 = vmatprep.subr.mxu0 0.0
    %50 = vmatpush1.msra.mxu0 %v38
    %51 = vmatprep.subr.mxu0 0.0
    %52 = vmatpush1.msra.mxu0 0.0
    %53 = vmatprep.subr.mxu0 0.0
    %54 = vmatpush1.msra.mxu0 0.0
    %55 = vmatprep.subr.mxu0 0.0
    %56 = vmatpush1.msra.mxu0 0.0
    %57 = vmatprep.subr.mxu0 0.0
    %58 = vmatpush1.msra.mxu0 0.0
    %59 = vmatprep.subr.mxu0 0.0
    %60 = vmatpush1.msra.mxu0 0.0
    %61 = vmatprep.subr.mxu0 0.0
    %62 = vmatpush1.msra.mxu0 0.0
    %63 = vmatprep.subr.mxu0 0.0
    %64 = vmatpush1.msra.mxu0 0.0
    %65 = vmatprep.subr.mxu0 0.0
    %66 = vmatpush1.msra.mxu0 0.0
    %67 = vmatprep.subr.mxu0 0.0
    %68 = vmatpush1.msra.mxu0 0.0
    %69 = vmatprep.subr.mxu0 0.0
    %70 = vmatpush1.msra.mxu0 0.0
    %71 = vmatprep.subr.mxu0 0.0
    %72 = vmatpush1.msra.mxu0 0.0
    %73 = vmatprep.subr.mxu0 0.0
    %74 = vmatpush1.msra.mxu0 0.0
    %75 = vmatprep.subr.mxu0 0.0
    %76 = vmatpush1.msra.mxu0 0.0
    %77 = vmatprep.subr.mxu0 0.0
    %78 = vmatpush1.msra.mxu0 0.0
    %79 = vmatprep.subr.mxu0 0.0
    %80 = vmatpush1.msra.mxu0 0.0
    %81 = vmatprep.subr.mxu0 0.0
    %82 = vmatpush1.msra.mxu0 0.0
    %83 = vmatprep.subr.mxu0 0.0
    %84 = vmatpush1.msra.mxu0 0.0
    %85 = vmatprep.subr.mxu0 0.0
    %86 = vmatpush1.msra.mxu0 0.0
    %87 = vmatprep.subr.mxu0 0.0
    %88 = vmatpush1.msra.mxu0 0.0
    %89 = vmatprep.subr.mxu0 0.0
    %90 = vmatpush1.msra.mxu0 0.0
    %91 = vmatprep.subr.mxu0 0.0
    %92 = vmatpush1.msra.mxu0 0.0
    %93 = vmatprep.subr.mxu0 0.0
    %94 = vmatpush1.msra.mxu0 0.0
    %95 = vmatprep.subr.mxu0 0.0
    %96 = vmatpush1.msra.mxu0 0.0
    %97 = vmatprep.subr.mxu0 0.0
    %98 = vmatpush1.msra.mxu0 0.0
    %99 = vmatprep.subr.mxu0 0.0
    %100 = vmatpush1.msra.mxu0 0.0
    %101 = vmatprep.subr.mxu0 0.0
    %102 = vmatpush1.msra.mxu0 0.0
    %103 = vmatprep.subr.mxu0 0.0
    %104 = vmatpush1.msra.mxu0 0.0
    %105 = vmatprep.subr.mxu0 0.0
    %106 = vmatpush1.msra.mxu0 0.0
    %107 = vmatprep.mubr.f32.mxu0 0.0
    %108 = vmatmul.mubr.f32.gmra.mrb[0].mxu0 %v41
    %v109 = vpop.f32.mrb[0].mxu0
    %v110 = vadd.f32 0.0, %v109
    %v111 = vpop.f32.mrb[0].mxu0
    %112 = vdwg.mxu0
    %vm113 = vcmask 130048
    %v115 = vsel %vm113, %v32, 0
    %117 = vmatprep.subr.mxu0 0.0
    %118 = vmatpush1.msra.mxu0 %v33
    %119 = vmatprep.subr.mxu0 0.0
    %120 = vmatpush1.msra.mxu0 %v34
    %121 = vmatprep.subr.mxu0 0.0
    %122 = vmatpush1.msra.mxu0 0.0
    %123 = vmatprep.subr.mxu0 0.0
    %124 = vmatpush1.msra.mxu0 0.0
    %125 = vmatprep.subr.mxu0 0.0
    %126 = vmatpush1.msra.mxu0 0.0
    %127 = vmatprep.subr.mxu0 0.0
    %128 = vmatpush1.msra.mxu0 0.0
    %129 = vmatprep.subr.mxu0 0.0
    %130 = vmatpush1.msra.mxu0 0.0
    %131 = vmatprep.subr.mxu0 0.0
    %132 = vmatpush1.msra.mxu0 0.0
    %133 = vmatprep.subr.mxu0 0.0
    %134 = vmatpush1.msra.mxu0 0.0
    %135 = vmatprep.subr.mxu0 0.0
    %136 = vmatpush1.msra.mxu0 0.0
    %137 = vmatprep.subr.mxu0 0.0
    %138 = vmatpush1.msra.mxu0 0.0
    %139 = vmatprep.subr.mxu0 0.0
    %140 = vmatpush1.msra.mxu0 0.0
    %141 = vmatprep.subr.mxu0 0.0
    %142 = vmatpush1.msra.mxu0 0.0
    %143 = vmatprep.subr.mxu0 0.0
    %144 = vmatpush1.msra.mxu0 0.0
    %145 = vmatprep.subr.mxu0 0.0
    %146 = vmatpush1.msra.mxu0 0.0
    %147 = vmatprep.subr.mxu0 0.0
    %148 = vmatpush1.msra.mxu0 0.0
    %149 = vmatprep.subr.mxu0 0.0
    %150 = vmatpush1.msra.mxu0 0.0
    %151 = vmatprep.subr.mxu0 0.0
    %152 = vmatpush1.msra.mxu0 0.0
    %153 = vmatprep.subr.mxu0 0.0
    %154 = vmatpush1.msra.mxu0 0.0
    %155 = vmatprep.subr.mxu0 0.0
    %156 = vmatpush1.msra.mxu0 0.0
    %157 = vmatprep.subr.mxu0 0.0
    %158 = vmatpush1.msra.mxu0 0.0
    %159 = vmatprep.subr.mxu0 0.0
    %160 = vmatpush1.msra.mxu0 0.0
    %161 = vmatprep.subr.mxu0 0.0
    %162 = vmatpush1.msra.mxu0 0.0
    %163 = vmatprep.subr.mxu0 0.0
    %164 = vmatpush1.msra.mxu0 0.0
    %165 = vmatprep.subr.mxu0 0.0
    %166 = vmatpush1.msra.mxu0 0.0
    %167 = vmatprep.subr.mxu0 0.0
    %168 = vmatpush1.msra.mxu0 0.0
    %169 = vmatprep.subr.mxu0 0.0
    %170 = vmatpush1.msra.mxu0 0.0
    %171 = vmatprep.subr.mxu0 0.0
    %172 = vmatpush1.msra.mxu0 0.0
    %173 = vmatprep.subr.mxu0 0.0
    %174 = vmatpush1.msra.mxu0 0.0
    %175 = vmatprep.subr.mxu0 0.0
    %176 = vmatpush1.msra.mxu0 0.0
    %177 = vmatprep.subr.mxu0 0.0
    %178 = vmatpush1.msra.mxu0 0.0
    %179 = vmatprep.subr.mxu0 0.0
    %180 = vmatpush1.msra.mxu0 0.0
    %181 = vmatprep.mubr.f32.mxu0 0.0
    %182 = vmatmul.mubr.f32.gmra.mrb[0].mxu0 %v115
    %v183 = vpop.f32.mrb[0].mxu0
    %v184 = vadd.f32 %v110, %v183
    %v185 = vpop.f32.mrb[0].mxu0
    %186 = vdwg.mxu0
    %v187 = vsub.f32 0.0, %v184
    %v188 = vmul.f32 %v187, 1.442695
    %v189 = vpow.pop %v188
    %v190 = vadd.f32 %v189, 1.0
    %v191 = vrcp.pop %v190
    %v192 = vmul.f32 1.0, %v191
    %v193 = vtanh.pop %v184
    %195 = vrot.lane.b32.xlu0 %v23, 32
    %v196 = vpop.permute.xlu0 %195
    %v198 = vmul.f32 %v192, %v196
    %200 = vrot.lane.b32.xlu0 %v193, 64
    %v201 = vpop.permute.xlu0 %200
    %v203 = vmul.f32 %v192, %v201
    %205 = vrot.lane.b32.xlu0 %v203, 32
    %v206 = vpop.permute.xlu0 %205
    %v208 = vadd.f32 %v198, %v206
    %v209 = vtanh.pop %v208
    %211 = vrot.lane.b32.xlu0 %v209, 64
    %v212 = vpop.permute.xlu0 %211
    %v214 = vmul.f32 %v192, %v212
    %s215 = scalar_lea.vmem %s0, 8
    %v216 = vld [vmem:[%s215] sm:$0xff]
    %217 = vset.pattern.permute.xlu0 0
    %218 = vperm.xlu0 %217, %v216
    %v219 = vpop.permute.xlu0 %218
    %vm220 = vcmp.eq.s32.totalorder %v219, %v26
    %v221 = vsel %vm220, 1, 0
    %v222 = vcvt.s32.f32 %v221
    %224 = vrot.lane.b32.xlu0 %v214, 32
    %v225 = vpop.permute.xlu0 %224
    %v226 = vsel %vm39, %v225, 0
    %228 = vmatprep.subr.mxu0 0.0
    %229 = vmatpush1.msra.mxu0 %v35
    %230 = vmatprep.subr.mxu0 0.0
    %231 = vmatpush1.msra.mxu0 %v36
    %232 = vmatprep.subr.mxu0 0.0
    %233 = vmatpush1.msra.mxu0 %v37
    %234 = vmatprep.subr.mxu0 0.0
    %235 = vmatpush1.msra.mxu0 %v38
    %236 = vmatprep.subr.mxu0 0.0
    %237 = vmatpush1.msra.mxu0 0.0
    %238 = vmatprep.subr.mxu0 0.0
    %239 = vmatpush1.msra.mxu0 0.0
    %240 = vmatprep.subr.mxu0 0.0
    %241 = vmatpush1.msra.mxu0 0.0
    %242 = vmatprep.subr.mxu0 0.0
    %243 = vmatpush1.msra.mxu0 0.0
    %244 = vmatprep.subr.mxu0 0.0
    %245 = vmatpush1.msra.mxu0 0.0
    %246 = vmatprep.subr.mxu0 0.0
    %247 = vmatpush1.msra.mxu0 0.0
    %248 = vmatprep.subr.mxu0 0.0
    %249 = vmatpush1.msra.mxu0 0.0
    %250 = vmatprep.subr.mxu0 0.0
    %251 = vmatpush1.msra.mxu0 0.0
    %252 = vmatprep.subr.mxu0 0.0
    %253 = vmatpush1.msra.mxu0 0.0
    %254 = vmatprep.subr.mxu0 0.0
    %255 = vmatpush1.msra.mxu0 0.0
    %256 = vmatprep.subr.mxu0 0.0
    %257 = vmatpush1.msra.mxu0 0.0
    %258 = vmatprep.subr.mxu0 0.0
    %259 = vmatpush1.msra.mxu0 0.0
    %260 = vmatprep.subr.mxu0 0.0
    %261 = vmatpush1.msra.mxu0 0.0
    %262 = vmatprep.subr.mxu0 0.0
    %263 = vmatpush1.msra.mxu0 0.0
    %264 = vmatprep.subr.mxu0 0.0
    %265 = vmatpush1.msra.mxu0 0.0
    %266 = vmatprep.subr.mxu0 0.0
    %267 = vmatpush1.msra.mxu0 0.0
    %268 = vmatprep.subr.mxu0 0.0
    %269 = vmatpush1.msra.mxu0 0.0
    %270 = vmatprep.subr.mxu0 0.0
    %271 = vmatpush1.msra.mxu0 0.0
    %272 = vmatprep.subr.mxu0 0.0
    %273 = vmatpush1.msra.mxu0 0.0
    %274 = vmatprep.subr.mxu0 0.0
    %275 = vmatpush1.msra.mxu0 0.0
    %276 = vmatprep.subr.mxu0 0.0
    %277 = vmatpush1.msra.mxu0 0.0
    %278 = vmatprep.subr.mxu0 0.0
    %279 = vmatpush1.msra.mxu0 0.0
    %280 = vmatprep.subr.mxu0 0.0
    %281 = vmatpush1.msra.mxu0 0.0
    %282 = vmatprep.subr.mxu0 0.0
    %283 = vmatpush1.msra.mxu0 0.0
    %284 = vmatprep.subr.mxu0 0.0
    %285 = vmatpush1.msra.mxu0 0.0
    %286 = vmatprep.subr.mxu0 0.0
    %287 = vmatpush1.msra.mxu0 0.0
    %288 = vmatprep.subr.mxu0 0.0
    %289 = vmatpush1.msra.mxu0 0.0
    %290 = vmatprep.subr.mxu0 0.0
    %291 = vmatpush1.msra.mxu0 0.0
    %292 = vmatprep.mubr.f32.mxu0 0.0
    %293 = vmatmul.mubr.f32.gmra.mrb[0].mxu0 %v226
    %v294 = vpop.f32.mrb[0].mxu0
    %v295 = vadd.f32 0.0, %v294
    %v296 = vpop.f32.mrb[0].mxu0
    %297 = vdwg.mxu0
    %v299 = vsel %vm113, %v222, 0
    %301 = vmatprep.subr.mxu0 0.0
    %302 = vmatpush1.msra.mxu0 %v33
    %303 = vmatprep.subr.mxu0 0.0
    %304 = vmatpush1.msra.mxu0 %v34
    %305 = vmatprep.subr.mxu0 0.0
    %306 = vmatpush1.msra.mxu0 0.0
    %307 = vmatprep.subr.mxu0 0.0
    %308 = vmatpush1.msra.mxu0 0.0
    %309 = vmatprep.subr.mxu0 0.0
    %310 = vmatpush1.msra.mxu0 0.0
    %311 = vmatprep.subr.mxu0 0.0
    %312 = vmatpush1.msra.mxu0 0.0
    %313 = vmatprep.subr.mxu0 0.0
    %314 = vmatpush1.msra.mxu0 0.0
    %315 = vmatprep.subr.mxu0 0.0
    %316 = vmatpush1.msra.mxu0 0.0
    %317 = vmatprep.subr.mxu0 0.0
    %318 = vmatpush1.msra.mxu0 0.0
    %319 = vmatprep.subr.mxu0 0.0
    %320 = vmatpush1.msra.mxu0 0.0
    %321 = vmatprep.subr.mxu0 0.0
    %322 = vmatpush1.msra.mxu0 0.0
    %323 = vmatprep.subr.mxu0 0.0
    %324 = vmatpush1.msra.mxu0 0.0
    %325 = vmatprep.subr.mxu0 0.0
    %326 = vmatpush1.msra.mxu0 0.0
    %327 = vmatprep.subr.mxu0 0.0
    %328 = vmatpush1.msra.mxu0 0.0
    %329 = vmatprep.subr.mxu0 0.0
    %330 = vmatpush1.msra.mxu0 0.0
    %331 = vmatprep.subr.mxu0 0.0
    %332 = vmatpush1.msra.mxu0 0.0
    %333 = vmatprep.subr.mxu0 0.0
    %334 = vmatpush1.msra.mxu0 0.0
    %335 = vmatprep.subr.mxu0 0.0
    %336 = vmatpush1.msra.mxu0 0.0
    %337 = vmatprep.subr.mxu0 0.0
    %338 = vmatpush1.msra.mxu0 0.0
    %339 = vmatprep.subr.mxu0 0.0
    %340 = vmatpush1.msra.mxu0 0.0
    %341 = vmatprep.subr.mxu0 0.0
    %342 = vmatpush1.msra.mxu0 0.0
    %343 = vmatprep.subr.mxu0 0.0
    %344 = vmatpush1.msra.mxu0 0.0
    %345 = vmatprep.subr.mxu0 0.0
    %346 = vmatpush1.msra.mxu0 0.0
    %347 = vmatprep.subr.mxu0 0.0
    %348 = vmatpush1.msra.mxu0 0.0
    %349 = vmatprep.subr.mxu0 0.0
    %350 = vmatpush1.msra.mxu0 0.0
    %351 = vmatprep.subr.mxu0 0.0
    %352 = vmatpush1.msra.mxu0 0.0
    %353 = vmatprep.subr.mxu0 0.0
    %354 = vmatpush1.msra.mxu0 0.0
    %355 = vmatprep.subr.mxu0 0.0
    %356 = vmatpush1.msra.mxu0 0.0
    %357 = vmatprep.subr.mxu0 0.0
    %358 = vmatpush1.msra.mxu0 0.0
    %359 = vmatprep.subr.mxu0 0.0
    %360 = vmatpush1.msra.mxu0 0.0
    %361 = vmatprep.subr.mxu0 0.0
    %362 = vmatpush1.msra.mxu0 0.0
    %363 = vmatprep.subr.mxu0 0.0
    %364 = vmatpush1.msra.mxu0 0.0
    %365 = vmatprep.mubr.f32.mxu0 0.0
    %366 = vmatmul.mubr.f32.gmra.mrb[0].mxu0 %v299
    %v367 = vpop.f32.mrb[0].mxu0
    %v368 = vadd.f32 %v295, %v367
    %v369 = vpop.f32.mrb[0].mxu0
    %370 = vdwg.mxu0
    %v371 = vsub.f32 0.0, %v368
    %v372 = vmul.f32 %v371, 1.442695
    %v373 = vpow.pop %v372
    %v374 = vadd.f32 %v373, 1.0
    %v375 = vrcp.pop %v374
    %v376 = vmul.f32 1.0, %v375
    %v377 = vtanh.pop %v368
    %v378 = vmul.f32 %v376, %v208
    %380 = vrot.lane.b32.xlu0 %v377, 64
    %v381 = vpop.permute.xlu0 %380
    %v383 = vmul.f32 %v376, %v381
    %385 = vrot.lane.b32.xlu0 %v383, 32
    %v386 = vpop.permute.xlu0 %385
    %v388 = vadd.f32 %v378, %v386
    %v389 = vtanh.pop %v388
    %391 = vrot.lane.b32.xlu0 %v389, 64
    %v392 = vpop.permute.xlu0 %391
    %v394 = vmul.f32 %v376, %v392
    %s395 = scalar_lea.vmem %s0, 16
    %v396 = vld [vmem:[%s395] sm:$0xff]
    %397 = vset.pattern.permute.xlu0 0
    %398 = vperm.xlu0 %397, %v396
    %v399 = vpop.permute.xlu0 %398
    %vm400 = vcmp.eq.s32.totalorder %v399, %v26
    %v401 = vsel %vm400, 1, 0
    %v402 = vcvt.s32.f32 %v401
    %404 = vrot.lane.b32.xlu0 %v394, 32
    %v405 = vpop.permute.xlu0 %404
    %v406 = vsel %vm39, %v405, 0
    %408 = vmatprep.subr.mxu0 0.0
    %409 = vmatpush1.msra.mxu0 %v35
    %410 = vmatprep.subr.mxu0 0.0
    %411 = vmatpush1.msra.mxu0 %v36
    %412 = vmatprep.subr.mxu0 0.0
    %413 = vmatpush1.msra.mxu0 %v37
    %414 = vmatprep.subr.mxu0 0.0
    %415 = vmatpush1.msra.mxu0 %v38
    %416 = vmatprep.subr.mxu0 0.0
    %417 = vmatpush1.msra.mxu0 0.0
    %418 = vmatprep.subr.mxu0 0.0
    %419 = vmatpush1.msra.mxu0 0.0
    %420 = vmatprep.subr.mxu0 0.0
    %421 = vmatpush1.msra.mxu0 0.0
    %422 = vmatprep.subr.mxu0 0.0
    %423 = vmatpush1.msra.mxu0 0.0
    %424 = vmatprep.subr.mxu0 0.0
    %425 = vmatpush1.msra.mxu0 0.0
    %426 = vmatprep.subr.mxu0 0.0
    %427 = vmatpush1.msra.mxu0 0.0
    %428 = vmatprep.subr.mxu0 0.0
    %429 = vmatpush1.msra.mxu0 0.0
    %430 = vmatprep.subr.mxu0 0.0
    %431 = vmatpush1.msra.mxu0 0.0
    %432 = vmatprep.subr.mxu0 0.0
    %433 = vmatpush1.msra.mxu0 0.0
    %434 = vmatprep.subr.mxu0 0.0
    %435 = vmatpush1.msra.mxu0 0.0
    %436 = vmatprep.subr.mxu0 0.0
    %437 = vmatpush1.msra.mxu0 0.0
    %438 = vmatprep.subr.mxu0 0.0
    %439 = vmatpush1.msra.mxu0 0.0
    %440 = vmatprep.subr.mxu0 0.0
    %441 = vmatpush1.msra.mxu0 0.0
    %442 = vmatprep.subr.mxu0 0.0
    %443 = vmatpush1.msra.mxu0 0.0
    %444 = vmatprep.subr.mxu0 0.0
    %445 = vmatpush1.msra.mxu0 0.0
    %446 = vmatprep.subr.mxu0 0.0
    %447 = vmatpush1.msra.mxu0 0.0
    %448 = vmatprep.subr.mxu0 0.0
    %449 = vmatpush1.msra.mxu0 0.0
    %450 = vmatprep.subr.mxu0 0.0
    %451 = vmatpush1.msra.mxu0 0.0
    %452 = vmatprep.subr.mxu0 0.0
    %453 = vmatpush1.msra.mxu0 0.0
    %454 = vmatprep.subr.mxu0 0.0
    %455 = vmatpush1.msra.mxu0 0.0
    %456 = vmatprep.subr.mxu0 0.0
    %457 = vmatpush1.msra.mxu0 0.0
    %458 = vmatprep.subr.mxu0 0.0
    %459 = vmatpush1.msra.mxu0 0.0
    %460 = vmatprep.subr.mxu0 0.0
    %461 = vmatpush1.msra.mxu0 0.0
    %462 = vmatprep.subr.mxu0 0.0
    %463 = vmatpush1.msra.mxu0 0.0
    %464 = vmatprep.subr.mxu0 0.0
    %465 = vmatpush1.msra.mxu0 0.0
    %466 = vmatprep.subr.mxu0 0.0
    %467 = vmatpush1.msra.mxu0 0.0
    %468 = vmatprep.subr.mxu0 0.0
    %469 = vmatpush1.msra.mxu0 0.0
    %470 = vmatprep.subr.mxu0 0.0
    %471 = vmatpush1.msra.mxu0 0.0
    %472 = vmatprep.mubr.f32.mxu0 0.0
    %473 = vmatmul.mubr.f32.gmra.mrb[0].mxu0 %v406
    %v474 = vpop.f32.mrb[0].mxu0
    %v475 = vadd.f32 0.0, %v474
    %v476 = vpop.f32.mrb[0].mxu0
    %477 = vdwg.mxu0
    %v479 = vsel %vm113, %v402, 0
    %481 = vmatprep.subr.mxu0 0.0
    %482 = vmatpush1.msra.mxu0 %v33
    %483 = vmatprep.subr.mxu0 0.0
    %484 = vmatpush1.msra.mxu0 %v34
    %485 = vmatprep.subr.mxu0 0.0
    %486 = vmatpush1.msra.mxu0 0.0
    %487 = vmatprep.subr.mxu0 0.0
    %488 = vmatpush1.msra.mxu0 0.0
    %489 = vmatprep.subr.mxu0 0.0
    %490 = vmatpush1.msra.mxu0 0.0
    %491 = vmatprep.subr.mxu0 0.0
    %492 = vmatpush1.msra.mxu0 0.0
    %493 = vmatprep.subr.mxu0 0.0
    %494 = vmatpush1.msra.mxu0 0.0
    %495 = vmatprep.subr.mxu0 0.0
    %496 = vmatpush1.msra.mxu0 0.0
    %497 = vmatprep.subr.mxu0 0.0
    %498 = vmatpush1.msra.mxu0 0.0
    %499 = vmatprep.subr.mxu0 0.0
    %500 = vmatpush1.msra.mxu0 0.0
    %501 = vmatprep.subr.mxu0 0.0
    %502 = vmatpush1.msra.mxu0 0.0
    %503 = vmatprep.subr.mxu0 0.0
    %504 = vmatpush1.msra.mxu0 0.0
    %505 = vmatprep.subr.mxu0 0.0
    %506 = vmatpush1.msra.mxu0 0.0
    %507 = vmatprep.subr.mxu0 0.0
    %508 = vmatpush1.msra.mxu0 0.0
    %509 = vmatprep.subr.mxu0 0.0
    %510 = vmatpush1.msra.mxu0 0.0
    %511 = vmatprep.subr.mxu0 0.0
    %512 = vmatpush1.msra.mxu0 0.0
    %513 = vmatprep.subr.mxu0 0.0
    %514 = vmatpush1.msra.mxu0 0.0
    %515 = vmatprep.subr.mxu0 0.0
    %516 = vmatpush1.msra.mxu0 0.0
    %517 = vmatprep.subr.mxu0 0.0
    %518 = vmatpush1.msra.mxu0 0.0
    %519 = vmatprep.subr.mxu0 0.0
    %520 = vmatpush1.msra.mxu0 0.0
    %521 = vmatprep.subr.mxu0 0.0
    %522 = vmatpush1.msra.mxu0 0.0
    %523 = vmatprep.subr.mxu0 0.0
    %524 = vmatpush1.msra.mxu0 0.0
    %525 = vmatprep.subr.mxu0 0.0
    %526 = vmatpush1.msra.mxu0 0.0
    %527 = vmatprep.subr.mxu0 0.0
    %528 = vmatpush1.msra.mxu0 0.0
    %529 = vmatprep.subr.mxu0 0.0
    %530 = vmatpush1.msra.mxu0 0.0
    %531 = vmatprep.subr.mxu0 0.0
    %532 = vmatpush1.msra.mxu0 0.0
    %533 = vmatprep.subr.mxu0 0.0
    %534 = vmatpush1.msra.mxu0 0.0
    %535 = vmatprep.subr.mxu0 0.0
    %536 = vmatpush1.msra.mxu0 0.0
    %537 = vmatprep.subr.mxu0 0.0
    %538 = vmatpush1.msra.mxu0 0.0
    %539 = vmatprep.subr.mxu0 0.0
    %540 = vmatpush1.msra.mxu0 0.0
    %541 = vmatprep.subr.mxu0 0.0
    %542 = vmatpush1.msra.mxu0 0.0
    %543 = vmatprep.subr.mxu0 0.0
    %544 = vmatpush1.msra.mxu0 0.0
    %545 = vmatprep.mubr.f32.mxu0 0.0
    %546 = vmatmul.mubr.f32.gmra.mrb[0].mxu0 %v479
    %v547 = vpop.f32.mrb[0].mxu0
    %v548 = vadd.f32 %v475, %v547
    %v549 = vpop.f32.mrb[0].mxu0
    %550 = vdwg.mxu0
    %v551 = vsub.f32 0.0, %v548
    %v552 = vmul.f32 %v551, 1.442695
    %v553 = vpow.pop %v552
    %v554 = vadd.f32 %v553, 1.0
    %v555 = vrcp.pop %v554
    %v556 = vmul.f32 1.0, %v555
    %v557 = vtanh.pop %v548
    %v558 = vmul.f32 %v556, %v388
    %560 = vrot.lane.b32.xlu0 %v557, 64
    %v561 = vpop.permute.xlu0 %560
    %v563 = vmul.f32 %v556, %v561
    %565 = vrot.lane.b32.xlu0 %v563, 32
    %v566 = vpop.permute.xlu0 %565
    %v568 = vadd.f32 %v558, %v566
    %v569 = vtanh.pop %v568
    %571 = vrot.lane.b32.xlu0 %v569, 64
    %v572 = vpop.permute.xlu0 %571
    %v574 = vmul.f32 %v556, %v572
    %s575 = scalar_lea.vmem %s0, 24
    %v576 = vld [vmem:[%s575] sm:$0xff]
    %577 = vset.pattern.permute.xlu0 0
    %578 = vperm.xlu0 %577, %v576
    %v579 = vpop.permute.xlu0 %578
    %vm580 = vcmp.eq.s32.totalorder %v579, %v26
    %v581 = vsel %vm580, 1, 0
    %v582 = vcvt.s32.f32 %v581
    %584 = vrot.lane.b32.xlu0 %v574, 32
    %v585 = vpop.permute.xlu0 %584
    %v586 = vsel %vm39, %v585, 0
    %588 = vmatprep.subr.mxu0 0.0
    %589 = vmatpush1.msra.mxu0 %v35
    %590 = vmatprep.subr.mxu0 0.0
    %591 = vmatpush1.msra.mxu0 %v36
    %592 = vmatprep.subr.mxu0 0.0
    %593 = vmatpush1.msra.mxu0 %v37
    %594 = vmatprep.subr.mxu0 0.0
    %595 = vmatpush1.msra.mxu0 %v38
    %596 = vmatprep.subr.mxu0 0.0
    %597 = vmatpush1.msra.mxu0 0.0
    %598 = vmatprep.subr.mxu0 0.0
    %599 = vmatpush1.msra.mxu0 0.0
    %600 = vmatprep.subr.mxu0 0.0
    %601 = vmatpush1.msra.mxu0 0.0
    %602 = vmatprep.subr.mxu0 0.0
    %603 = vmatpush1.msra.mxu0 0.0
    %604 = vmatprep.subr.mxu0 0.0
    %605 = vmatpush1.msra.mxu0 0.0
    %606 = vmatprep.subr.mxu0 0.0
    %607 = vmatpush1.msra.mxu0 0.0
    %608 = vmatprep.subr.mxu0 0.0
    %609 = vmatpush1.msra.mxu0 0.0
    %610 = vmatprep.subr.mxu0 0.0
    %611 = vmatpush1.msra.mxu0 0.0
    %612 = vmatprep.subr.mxu0 0.0
    %613 = vmatpush1.msra.mxu0 0.0
    %614 = vmatprep.subr.mxu0 0.0
    %615 = vmatpush1.msra.mxu0 0.0
    %616 = vmatprep.subr.mxu0 0.0
    %617 = vmatpush1.msra.mxu0 0.0
    %618 = vmatprep.subr.mxu0 0.0
    %619 = vmatpush1.msra.mxu0 0.0
    %620 = vmatprep.subr.mxu0 0.0
    %621 = vmatpush1.msra.mxu0 0.0
    %622 = vmatprep.subr.mxu0 0.0
    %623 = vmatpush1.msra.mxu0 0.0
    %624 = vmatprep.subr.mxu0 0.0
    %625 = vmatpush1.msra.mxu0 0.0
    %626 = vmatprep.subr.mxu0 0.0
    %627 = vmatpush1.msra.mxu0 0.0
    %628 = vmatprep.subr.mxu0 0.0
    %629 = vmatpush1.msra.mxu0 0.0
    %630 = vmatprep.subr.mxu0 0.0
    %631 = vmatpush1.msra.mxu0 0.0
    %632 = vmatprep.subr.mxu0 0.0
    %633 = vmatpush1.msra.mxu0 0.0
    %634 = vmatprep.subr.mxu0 0.0
    %635 = vmatpush1.msra.mxu0 0.0
    %636 = vmatprep.subr.mxu0 0.0
    %637 = vmatpush1.msra.mxu0 0.0
    %638 = vmatprep.subr.mxu0 0.0
    %639 = vmatpush1.msra.mxu0 0.0
    %640 = vmatprep.subr.mxu0 0.0
    %641 = vmatpush1.msra.mxu0 0.0
    %642 = vmatprep.subr.mxu0 0.0
    %643 = vmatpush1.msra.mxu0 0.0
    %644 = vmatprep.subr.mxu0 0.0
    %645 = vmatpush1.msra.mxu0 0.0
    %646 = vmatprep.subr.mxu0 0.0
    %647 = vmatpush1.msra.mxu0 0.0
    %648 = vmatprep.subr.mxu0 0.0
    %649 = vmatpush1.msra.mxu0 0.0
    %650 = vmatprep.subr.mxu0 0.0
    %651 = vmatpush1.msra.mxu0 0.0
    %652 = vmatprep.mubr.f32.mxu0 0.0
    %653 = vmatmul.mubr.f32.gmra.mrb[0].mxu0 %v586
    %v654 = vpop.f32.mrb[0].mxu0
    %v655 = vadd.f32 0.0, %v654
    %v656 = vpop.f32.mrb[0].mxu0
    %657 = vdwg.mxu0
    %v659 = vsel %vm113, %v582, 0
    %661 = vmatprep.subr.mxu0 0.0
    %662 = vmatpush1.msra.mxu0 %v33
    %663 = vmatprep.subr.mxu0 0.0
    %664 = vmatpush1.msra.mxu0 %v34
    %665 = vmatprep.subr.mxu0 0.0
    %666 = vmatpush1.msra.mxu0 0.0
    %667 = vmatprep.subr.mxu0 0.0
    %668 = vmatpush1.msra.mxu0 0.0
    %669 = vmatprep.subr.mxu0 0.0
    %670 = vmatpush1.msra.mxu0 0.0
    %671 = vmatprep.subr.mxu0 0.0
    %672 = vmatpush1.msra.mxu0 0.0
    %673 = vmatprep.subr.mxu0 0.0
    %674 = vmatpush1.msra.mxu0 0.0
    %675 = vmatprep.subr.mxu0 0.0
    %676 = vmatpush1.msra.mxu0 0.0
    %677 = vmatprep.subr.mxu0 0.0
    %678 = vmatpush1.msra.mxu0 0.0
    %679 = vmatprep.subr.mxu0 0.0
    %680 = vmatpush1.msra.mxu0 0.0
    %681 = vmatprep.subr.mxu0 0.0
    %682 = vmatpush1.msra.mxu0 0.0
    %683 = vmatprep.subr.mxu0 0.0
    %684 = vmatpush1.msra.mxu0 0.0
    %685 = vmatprep.subr.mxu0 0.0
    %686 = vmatpush1.msra.mxu0 0.0
    %687 = vmatprep.subr.mxu0 0.0
    %688 = vmatpush1.msra.mxu0 0.0
    %689 = vmatprep.subr.mxu0 0.0
    %690 = vmatpush1.msra.mxu0 0.0
    %691 = vmatprep.subr.mxu0 0.0
    %692 = vmatpush1.msra.mxu0 0.0
    %693 = vmatprep.subr.mxu0 0.0
    %694 = vmatpush1.msra.mxu0 0.0
    %695 = vmatprep.subr.mxu0 0.0
    %696 = vmatpush1.msra.mxu0 0.0
    %697 = vmatprep.subr.mxu0 0.0
    %698 = vmatpush1.msra.mxu0 0.0
    %699 = vmatprep.subr.mxu0 0.0
    %700 = vmatpush1.msra.mxu0 0.0
    %701 = vmatprep.subr.mxu0 0.0
    %702 = vmatpush1.msra.mxu0 0.0
    %703 = vmatprep.subr.mxu0 0.0
    %704 = vmatpush1.msra.mxu0 0.0
    %705 = vmatprep.subr.mxu0 0.0
    %706 = vmatpush1.msra.mxu0 0.0
    %707 = vmatprep.subr.mxu0 0.0
    %708 = vmatpush1.msra.mxu0 0.0
    %709 = vmatprep.subr.mxu0 0.0
    %710 = vmatpush1.msra.mxu0 0.0
    %711 = vmatprep.subr.mxu0 0.0
    %712 = vmatpush1.msra.mxu0 0.0
    %713 = vmatprep.subr.mxu0 0.0
    %714 = vmatpush1.msra.mxu0 0.0
    %715 = vmatprep.subr.mxu0 0.0
    %716 = vmatpush1.msra.mxu0 0.0
    %717 = vmatprep.subr.mxu0 0.0
    %718 = vmatpush1.msra.mxu0 0.0
    %719 = vmatprep.subr.mxu0 0.0
    %720 = vmatpush1.msra.mxu0 0.0
    %721 = vmatprep.subr.mxu0 0.0
    %722 = vmatpush1.msra.mxu0 0.0
    %723 = vmatprep.subr.mxu0 0.0
    %724 = vmatpush1.msra.mxu0 0.0
    %725 = vmatprep.mubr.f32.mxu0 0.0
    %726 = vmatmul.mubr.f32.gmra.mrb[0].mxu0 %v659
    %v727 = vpop.f32.mrb[0].mxu0
    %v728 = vadd.f32 %v655, %v727
    %v729 = vpop.f32.mrb[0].mxu0
    %730 = vdwg.mxu0
    %v731 = vsub.f32 0.0, %v728
    %v732 = vmul.f32 %v731, 1.442695
    %v733 = vpow.pop %v732
    %v734 = vadd.f32 %v733, 1.0
    %v735 = vrcp.pop %v734
    %v736 = vmul.f32 1.0, %v735
    %v737 = vtanh.pop %v728
    %v738 = vmul.f32 %v736, %v568
    %740 = vrot.lane.b32.xlu0 %v737, 64
    %v741 = vpop.permute.xlu0 %740
    %v743 = vmul.f32 %v736, %v741
    %745 = vrot.lane.b32.xlu0 %v743, 32
    %v746 = vpop.permute.xlu0 %745
    %v748 = vadd.f32 %v738, %v746
    %v749 = vtanh.pop %v748
    %751 = vrot.lane.b32.xlu0 %v749, 64
    %v752 = vpop.permute.xlu0 %751
    %v754 = vmul.f32 %v736, %v752
    %s755 = scalar_lea.vmem %s0, 32
    %v756 = vld [vmem:[%s755] sm:$0xff]
    %757 = vset.pattern.permute.xlu0 0
    %758 = vperm.xlu0 %757, %v756
    %v759 = vpop.permute.xlu0 %758
    %vm760 = vcmp.eq.s32.totalorder %v759, %v26
    %v761 = vsel %vm760, 1, 0
    %v762 = vcvt.s32.f32 %v761
    %764 = vrot.lane.b32.xlu0 %v754, 32
    %v765 = vpop.permute.xlu0 %764
    %v766 = vsel %vm39, %v765, 0
    %768 = vmatprep.subr.mxu0 0.0
    %769 = vmatpush1.msra.mxu0 %v35
    %770 = vmatprep.subr.mxu0 0.0
    %771 = vmatpush1.msra.mxu0 %v36
    %772 = vmatprep.subr.mxu0 0.0
    %773 = vmatpush1.msra.mxu0 %v37
    %774 = vmatprep.subr.mxu0 0.0
    %775 = vmatpush1.msra.mxu0 %v38
    %776 = vmatprep.subr.mxu0 0.0
    %777 = vmatpush1.msra.mxu0 0.0
    %778 = vmatprep.subr.mxu0 0.0
    %779 = vmatpush1.msra.mxu0 0.0
    %780 = vmatprep.subr.mxu0 0.0
    %781 = vmatpush1.msra.mxu0 0.0
    %782 = vmatprep.subr.mxu0 0.0
    %783 = vmatpush1.msra.mxu0 0.0
    %784 = vmatprep.subr.mxu0 0.0
    %785 = vmatpush1.msra.mxu0 0.0
    %786 = vmatprep.subr.mxu0 0.0
    %787 = vmatpush1.msra.mxu0 0.0
    %788 = vmatprep.subr.mxu0 0.0
    %789 = vmatpush1.msra.mxu0 0.0
    %790 = vmatprep.subr.mxu0 0.0
    %791 = vmatpush1.msra.mxu0 0.0
    %792 = vmatprep.subr.mxu0 0.0
    %793 = vmatpush1.msra.mxu0 0.0
    %794 = vmatprep.subr.mxu0 0.0
    %795 = vmatpush1.msra.mxu0 0.0
    %796 = vmatprep.subr.mxu0 0.0
    %797 = vmatpush1.msra.mxu0 0.0
    %798 = vmatprep.subr.mxu0 0.0
    %799 = vmatpush1.msra.mxu0 0.0
    %800 = vmatprep.subr.mxu0 0.0
    %801 = vmatpush1.msra.mxu0 0.0
    %802 = vmatprep.subr.mxu0 0.0
    %803 = vmatpush1.msra.mxu0 0.0
    %804 = vmatprep.subr.mxu0 0.0
    %805 = vmatpush1.msra.mxu0 0.0
    %806 = vmatprep.subr.mxu0 0.0
    %807 = vmatpush1.msra.mxu0 0.0
    %808 = vmatprep.subr.mxu0 0.0
    %809 = vmatpush1.msra.mxu0 0.0
    %810 = vmatprep.subr.mxu0 0.0
    %811 = vmatpush1.msra.mxu0 0.0
    %812 = vmatprep.subr.mxu0 0.0
    %813 = vmatpush1.msra.mxu0 0.0
    %814 = vmatprep.subr.mxu0 0.0
    %815 = vmatpush1.msra.mxu0 0.0
    %816 = vmatprep.subr.mxu0 0.0
    %817 = vmatpush1.msra.mxu0 0.0
    %818 = vmatprep.subr.mxu0 0.0
    %819 = vmatpush1.msra.mxu0 0.0
    %820 = vmatprep.subr.mxu0 0.0
    %821 = vmatpush1.msra.mxu0 0.0
    %822 = vmatprep.subr.mxu0 0.0
    %823 = vmatpush1.msra.mxu0 0.0
    %824 = vmatprep.subr.mxu0 0.0
    %825 = vmatpush1.msra.mxu0 0.0
    %826 = vmatprep.subr.mxu0 0.0
    %827 = vmatpush1.msra.mxu0 0.0
    %828 = vmatprep.subr.mxu0 0.0
    %829 = vmatpush1.msra.mxu0 0.0
    %830 = vmatprep.subr.mxu0 0.0
    %831 = vmatpush1.msra.mxu0 0.0
    %832 = vmatprep.mubr.f32.mxu0 0.0
    %833 = vmatmul.mubr.f32.gmra.mrb[0].mxu0 %v766
    %v834 = vpop.f32.mrb[0].mxu0
    %v835 = vadd.f32 0.0, %v834
    %v836 = vpop.f32.mrb[0].mxu0
    %837 = vdwg.mxu0
    %v839 = vsel %vm113, %v762, 0
    %841 = vmatprep.subr.mxu0 0.0
    %842 = vmatpush1.msra.mxu0 %v33
    %843 = vmatprep.subr.mxu0 0.0
    %844 = vmatpush1.msra.mxu0 %v34
    %845 = vmatprep.subr.mxu0 0.0
    %846 = vmatpush1.msra.mxu0 0.0
    %847 = vmatprep.subr.mxu0 0.0
    %848 = vmatpush1.msra.mxu0 0.0
    %849 = vmatprep.subr.mxu0 0.0
    %850 = vmatpush1.msra.mxu0 0.0
    %851 = vmatprep.subr.mxu0 0.0
    %852 = vmatpush1.msra.mxu0 0.0
    %853 = vmatprep.subr.mxu0 0.0
    %854 = vmatpush1.msra.mxu0 0.0
    %855 = vmatprep.subr.mxu0 0.0
    %856 = vmatpush1.msra.mxu0 0.0
    %857 = vmatprep.subr.mxu0 0.0
    %858 = vmatpush1.msra.mxu0 0.0
    %859 = vmatprep.subr.mxu0 0.0
    %860 = vmatpush1.msra.mxu0 0.0
    %861 = vmatprep.subr.mxu0 0.0
    %862 = vmatpush1.msra.mxu0 0.0
    %863 = vmatprep.subr.mxu0 0.0
    %864 = vmatpush1.msra.mxu0 0.0
    %865 = vmatprep.subr.mxu0 0.0
    %866 = vmatpush1.msra.mxu0 0.0
    %867 = vmatprep.subr.mxu0 0.0
    %868 = vmatpush1.msra.mxu0 0.0
    %869 = vmatprep.subr.mxu0 0.0
    %870 = vmatpush1.msra.mxu0 0.0
    %871 = vmatprep.subr.mxu0 0.0
    %872 = vmatpush1.msra.mxu0 0.0
    %873 = vmatprep.subr.mxu0 0.0
    %874 = vmatpush1.msra.mxu0 0.0
    %875 = vmatprep.subr.mxu0 0.0
    %876 = vmatpush1.msra.mxu0 0.0
    %877 = vmatprep.subr.mxu0 0.0
    %878 = vmatpush1.msra.mxu0 0.0
    %879 = vmatprep.subr.mxu0 0.0
    %880 = vmatpush1.msra.mxu0 0.0
    %881 = vmatprep.subr.mxu0 0.0
    %882 = vmatpush1.msra.mxu0 0.0
    %883 = vmatprep.subr.mxu0 0.0
    %884 = vmatpush1.msra.mxu0 0.0
    %885 = vmatprep.subr.mxu0 0.0
    %886 = vmatpush1.msra.mxu0 0.0
    %887 = vmatprep.subr.mxu0 0.0
    %888 = vmatpush1.msra.mxu0 0.0
    %889 = vmatprep.subr.mxu0 0.0
    %890 = vmatpush1.msra.mxu0 0.0
    %891 = vmatprep.subr.mxu0 0.0
    %892 = vmatpush1.msra.mxu0 0.0
    %893 = vmatprep.subr.mxu0 0.0
    %894 = vmatpush1.msra.mxu0 0.0
    %895 = vmatprep.subr.mxu0 0.0
    %896 = vmatpush1.msra.mxu0 0.0
    %897 = vmatprep.subr.mxu0 0.0
    %898 = vmatpush1.msra.mxu0 0.0
    %899 = vmatprep.subr.mxu0 0.0
    %900 = vmatpush1.msra.mxu0 0.0
    %901 = vmatprep.subr.mxu0 0.0
    %902 = vmatpush1.msra.mxu0 0.0
    %903 = vmatprep.subr.mxu0 0.0
    %904 = vmatpush1.msra.mxu0 0.0
    %905 = vmatprep.mubr.f32.mxu0 0.0
    %906 = vmatmul.mubr.f32.gmra.mrb[0].mxu0 %v839
    %v907 = vpop.f32.mrb[0].mxu0
    %v908 = vadd.f32 %v835, %v907
    %v909 = vpop.f32.mrb[0].mxu0
    %910 = vdwg.mxu0
    %v911 = vsub.f32 0.0, %v908
    %v912 = vmul.f32 %v911, 1.442695
    %v913 = vpow.pop %v912
    %v914 = vadd.f32 %v913, 1.0
    %v915 = vrcp.pop %v914
    %v916 = vmul.f32 1.0, %v915
    %v917 = vtanh.pop %v908
    %v918 = vmul.f32 %v916, %v748
    %920 = vrot.lane.b32.xlu0 %v917, 64
    %v921 = vpop.permute.xlu0 %920
    %v923 = vmul.f32 %v916, %v921
    %925 = vrot.lane.b32.xlu0 %v923, 32
    %v926 = vpop.permute.xlu0 %925
    %v928 = vadd.f32 %v918, %v926
    %v929 = vtanh.pop %v928
    %931 = vrot.lane.b32.xlu0 %v929, 64
    %v932 = vpop.permute.xlu0 %931
    %v934 = vmul.f32 %v916, %v932
    %s935 = scalar_lea.vmem %s0, 40
    %v936 = vld [vmem:[%s935] sm:$0xff]
    %937 = vset.pattern.permute.xlu0 0
    %938 = vperm.xlu0 %937, %v936
    %v939 = vpop.permute.xlu0 %938
    %vm940 = vcmp.eq.s32.totalorder %v939, %v26
    %v941 = vsel %vm940, 1, 0
    %v942 = vcvt.s32.f32 %v941
    %944 = vrot.lane.b32.xlu0 %v934, 32
    %v945 = vpop.permute.xlu0 %944
    %v946 = vsel %vm39, %v945, 0
    %948 = vmatprep.subr.mxu0 0.0
    %949 = vmatpush1.msra.mxu0 %v35
    %950 = vmatprep.subr.mxu0 0.0
    %951 = vmatpush1.msra.mxu0 %v36
    %952 = vmatprep.subr.mxu0 0.0
    %953 = vmatpush1.msra.mxu0 %v37
    %954 = vmatprep.subr.mxu0 0.0
    %955 = vmatpush1.msra.mxu0 %v38
    %956 = vmatprep.subr.mxu0 0.0
    %957 = vmatpush1.msra.mxu0 0.0
    %958 = vmatprep.subr.mxu0 0.0
    %959 = vmatpush1.msra.mxu0 0.0
    %960 = vmatprep.subr.mxu0 0.0
    %961 = vmatpush1.msra.mxu0 0.0
    %962 = vmatprep.subr.mxu0 0.0
    %963 = vmatpush1.msra.mxu0 0.0
    %964 = vmatprep.subr.mxu0 0.0
    %965 = vmatpush1.msra.mxu0 0.0
    %966 = vmatprep.subr.mxu0 0.0
    %967 = vmatpush1.msra.mxu0 0.0
    %968 = vmatprep.subr.mxu0 0.0
    %969 = vmatpush1.msra.mxu0 0.0
    %970 = vmatprep.subr.mxu0 0.0
    %971 = vmatpush1.msra.mxu0 0.0
    %972 = vmatprep.subr.mxu0 0.0
    %973 = vmatpush1.msra.mxu0 0.0
    %974 = vmatprep.subr.mxu0 0.0
    %975 = vmatpush1.msra.mxu0 0.0
    %976 = vmatprep.subr.mxu0 0.0
    %977 = vmatpush1.msra.mxu0 0.0
    %978 = vmatprep.subr.mxu0 0.0
    %979 = vmatpush1.msra.mxu0 0.0
    %980 = vmatprep.subr.mxu0 0.0
    %981 = vmatpush1.msra.mxu0 0.0
    %982 = vmatprep.subr.mxu0 0.0
    %983 = vmatpush1.msra.mxu0 0.0
    %984 = vmatprep.subr.mxu0 0.0
    %985 = vmatpush1.msra.mxu0 0.0
    %986 = vmatprep.subr.mxu0 0.0
    %987 = vmatpush1.msra.mxu0 0.0
    %988 = vmatprep.subr.mxu0 0.0
    %989 = vmatpush1.msra.mxu0 0.0
    %990 = vmatprep.subr.mxu0 0.0
    %991 = vmatpush1.msra.mxu0 0.0
    %992 = vmatprep.subr.mxu0 0.0
    %993 = vmatpush1.msra.mxu0 0.0
    %994 = vmatprep.subr.mxu0 0.0
    %995 = vmatpush1.msra.mxu0 0.0
    %996 = vmatprep.subr.mxu0 0.0
    %997 = vmatpush1.msra.mxu0 0.0
    %998 = vmatprep.subr.mxu0 0.0
    %999 = vmatpush1.msra.mxu0 0.0
    %1000 = vmatprep.subr.mxu0 0.0
    %1001 = vmatpush1.msra.mxu0 0.0
    %1002 = vmatprep.subr.mxu0 0.0
    %1003 = vmatpush1.msra.mxu0 0.0
    %1004 = vmatprep.subr.mxu0 0.0
    %1005 = vmatpush1.msra.mxu0 0.0
    %1006 = vmatprep.subr.mxu0 0.0
    %1007 = vmatpush1.msra.mxu0 0.0
    %1008 = vmatprep.subr.mxu0 0.0
    %1009 = vmatpush1.msra.mxu0 0.0
    %1010 = vmatprep.subr.mxu0 0.0
    %1011 = vmatpush1.msra.mxu0 0.0
    %1012 = vmatprep.mubr.f32.mxu0 0.0
    %1013 = vmatmul.mubr.f32.gmra.mrb[0].mxu0 %v946
    %v1014 = vpop.f32.mrb[0].mxu0
    %v1015 = vadd.f32 0.0, %v1014
    %v1016 = vpop.f32.mrb[0].mxu0
    %1017 = vdwg.mxu0
    %v1019 = vsel %vm113, %v942, 0
    %1021 = vmatprep.subr.mxu0 0.0
    %1022 = vmatpush1.msra.mxu0 %v33
    %1023 = vmatprep.subr.mxu0 0.0
    %1024 = vmatpush1.msra.mxu0 %v34
    %1025 = vmatprep.subr.mxu0 0.0
    %1026 = vmatpush1.msra.mxu0 0.0
    %1027 = vmatprep.subr.mxu0 0.0
    %1028 = vmatpush1.msra.mxu0 0.0
    %1029 = vmatprep.subr.mxu0 0.0
    %1030 = vmatpush1.msra.mxu0 0.0
    %1031 = vmatprep.subr.mxu0 0.0
    %1032 = vmatpush1.msra.mxu0 0.0
    %1033 = vmatprep.subr.mxu0 0.0
    %1034 = vmatpush1.msra.mxu0 0.0
    %1035 = vmatprep.subr.mxu0 0.0
    %1036 = vmatpush1.msra.mxu0 0.0
    %1037 = vmatprep.subr.mxu0 0.0
    %1038 = vmatpush1.msra.mxu0 0.0
    %1039 = vmatprep.subr.mxu0 0.0
    %1040 = vmatpush1.msra.mxu0 0.0
    %1041 = vmatprep.subr.mxu0 0.0
    %1042 = vmatpush1.msra.mxu0 0.0
    %1043 = vmatprep.subr.mxu0 0.0
    %1044 = vmatpush1.msra.mxu0 0.0
    %1045 = vmatprep.subr.mxu0 0.0
    %1046 = vmatpush1.msra.mxu0 0.0
    %1047 = vmatprep.subr.mxu0 0.0
    %1048 = vmatpush1.msra.mxu0 0.0
    %1049 = vmatprep.subr.mxu0 0.0
    %1050 = vmatpush1.msra.mxu0 0.0
    %1051 = vmatprep.subr.mxu0 0.0
    %1052 = vmatpush1.msra.mxu0 0.0
    %1053 = vmatprep.subr.mxu0 0.0
    %1054 = vmatpush1.msra.mxu0 0.0
    %1055 = vmatprep.subr.mxu0 0.0
    %1056 = vmatpush1.msra.mxu0 0.0
    %1057 = vmatprep.subr.mxu0 0.0
    %1058 = vmatpush1.msra.mxu0 0.0
    %1059 = vmatprep.subr.mxu0 0.0
    %1060 = vmatpush1.msra.mxu0 0.0
    %1061 = vmatprep.subr.mxu0 0.0
    %1062 = vmatpush1.msra.mxu0 0.0
    %1063 = vmatprep.subr.mxu0 0.0
    %1064 = vmatpush1.msra.mxu0 0.0
    %1065 = vmatprep.subr.mxu0 0.0
    %1066 = vmatpush1.msra.mxu0 0.0
    %1067 = vmatprep.subr.mxu0 0.0
    %1068 = vmatpush1.msra.mxu0 0.0
    %1069 = vmatprep.subr.mxu0 0.0
    %1070 = vmatpush1.msra.mxu0 0.0
    %1071 = vmatprep.subr.mxu0 0.0
    %1072 = vmatpush1.msra.mxu0 0.0
    %1073 = vmatprep.subr.mxu0 0.0
    %1074 = vmatpush1.msra.mxu0 0.0
    %1075 = vmatprep.subr.mxu0 0.0
    %1076 = vmatpush1.msra.mxu0 0.0
    %1077 = vmatprep.subr.mxu0 0.0
    %1078 = vmatpush1.msra.mxu0 0.0
    %1079 = vmatprep.subr.mxu0 0.0
    %1080 = vmatpush1.msra.mxu0 0.0
    %1081 = vmatprep.subr.mxu0 0.0
    %1082 = vmatpush1.msra.mxu0 0.0
    %1083 = vmatprep.subr.mxu0 0.0
    %1084 = vmatpush1.msra.mxu0 0.0
    %1085 = vmatprep.mubr.f32.mxu0 0.0
    %1086 = vmatmul.mubr.f32.gmra.mrb[0].mxu0 %v1019
    %v1087 = vpop.f32.mrb[0].mxu0
    %v1088 = vadd.f32 %v1015, %v1087
    %v1089 = vpop.f32.mrb[0].mxu0
    %1090 = vdwg.mxu0
    %v1091 = vsub.f32 0.0, %v1088
    %v1092 = vmul.f32 %v1091, 1.442695
    %v1093 = vpow.pop %v1092
    %v1094 = vadd.f32 %v1093, 1.0
    %v1095 = vrcp.pop %v1094
    %v1096 = vmul.f32 1.0, %v1095
    %v1097 = vtanh.pop %v1088
    %v1098 = vmul.f32 %v1096, %v928
    %1100 = vrot.lane.b32.xlu0 %v1097, 64
    %v1101 = vpop.permute.xlu0 %1100
    %v1103 = vmul.f32 %v1096, %v1101
    %1105 = vrot.lane.b32.xlu0 %v1103, 32
    %v1106 = vpop.permute.xlu0 %1105
    %v1108 = vadd.f32 %v1098, %v1106
    %v1109 = vtanh.pop %v1108
    %1111 = vrot.lane.b32.xlu0 %v1109, 64
    %v1112 = vpop.permute.xlu0 %1111
    %v1114 = vmul.f32 %v1096, %v1112
    %s1115 = scalar_lea.vmem %s0, 48
    %v1116 = vld [vmem:[%s1115] sm:$0xff]
    %1117 = vset.pattern.permute.xlu0 0
    %1118 = vperm.xlu0 %1117, %v1116
    %v1119 = vpop.permute.xlu0 %1118
    %vm1120 = vcmp.eq.s32.totalorder %v1119, %v26
    %v1121 = vsel %vm1120, 1, 0
    %v1122 = vcvt.s32.f32 %v1121
    %1124 = vrot.lane.b32.xlu0 %v1114, 32
    %v1125 = vpop.permute.xlu0 %1124
    %v1126 = vsel %vm39, %v1125, 0
    %1128 = vmatprep.subr.mxu0 0.0
    %1129 = vmatpush1.msra.mxu0 %v35
    %1130 = vmatprep.subr.mxu0 0.0
    %1131 = vmatpush1.msra.mxu0 %v36
    %1132 = vmatprep.subr.mxu0 0.0
    %1133 = vmatpush1.msra.mxu0 %v37
    %1134 = vmatprep.subr.mxu0 0.0
    %1135 = vmatpush1.msra.mxu0 %v38
    %1136 = vmatprep.subr.mxu0 0.0
    %1137 = vmatpush1.msra.mxu0 0.0
    %1138 = vmatprep.subr.mxu0 0.0
    %1139 = vmatpush1.msra.mxu0 0.0
    %1140 = vmatprep.subr.mxu0 0.0
    %1141 = vmatpush1.msra.mxu0 0.0
    %1142 = vmatprep.subr.mxu0 0.0
    %1143 = vmatpush1.msra.mxu0 0.0
    %1144 = vmatprep.subr.mxu0 0.0
    %1145 = vmatpush1.msra.mxu0 0.0
    %1146 = vmatprep.subr.mxu0 0.0
    %1147 = vmatpush1.msra.mxu0 0.0
    %1148 = vmatprep.subr.mxu0 0.0
    %1149 = vmatpush1.msra.mxu0 0.0
    %1150 = vmatprep.subr.mxu0 0.0
    %1151 = vmatpush1.msra.mxu0 0.0
    %1152 = vmatprep.subr.mxu0 0.0
    %1153 = vmatpush1.msra.mxu0 0.0
    %1154 = vmatprep.subr.mxu0 0.0
    %1155 = vmatpush1.msra.mxu0 0.0
    %1156 = vmatprep.subr.mxu0 0.0
    %1157 = vmatpush1.msra.mxu0 0.0
    %1158 = vmatprep.subr.mxu0 0.0
    %1159 = vmatpush1.msra.mxu0 0.0
    %1160 = vmatprep.subr.mxu0 0.0
    %1161 = vmatpush1.msra.mxu0 0.0
    %1162 = vmatprep.subr.mxu0 0.0
    %1163 = vmatpush1.msra.mxu0 0.0
    %1164 = vmatprep.subr.mxu0 0.0
    %1165 = vmatpush1.msra.mxu0 0.0
    %1166 = vmatprep.subr.mxu0 0.0
    %1167 = vmatpush1.msra.mxu0 0.0
    %1168 = vmatprep.subr.mxu0 0.0
    %1169 = vmatpush1.msra.mxu0 0.0
    %1170 = vmatprep.subr.mxu0 0.0
    %1171 = vmatpush1.msra.mxu0 0.0
    %1172 = vmatprep.subr.mxu0 0.0
    %1173 = vmatpush1.msra.mxu0 0.0
    %1174 = vmatprep.subr.mxu0 0.0
    %1175 = vmatpush1.msra.mxu0 0.0
    %1176 = vmatprep.subr.mxu0 0.0
    %1177 = vmatpush1.msra.mxu0 0.0
    %1178 = vmatprep.subr.mxu0 0.0
    %1179 = vmatpush1.msra.mxu0 0.0
    %1180 = vmatprep.subr.mxu0 0.0
    %1181 = vmatpush1.msra.mxu0 0.0
    %1182 = vmatprep.subr.mxu0 0.0
    %1183 = vmatpush1.msra.mxu0 0.0
    %1184 = vmatprep.subr.mxu0 0.0
    %1185 = vmatpush1.msra.mxu0 0.0
    %1186 = vmatprep.subr.mxu0 0.0
    %1187 = vmatpush1.msra.mxu0 0.0
    %1188 = vmatprep.subr.mxu0 0.0
    %1189 = vmatpush1.msra.mxu0 0.0
    %1190 = vmatprep.subr.mxu0 0.0
    %1191 = vmatpush1.msra.mxu0 0.0
    %1192 = vmatprep.mubr.f32.mxu0 0.0
    %1193 = vmatmul.mubr.f32.gmra.mrb[0].mxu0 %v1126
    %v1194 = vpop.f32.mrb[0].mxu0
    %v1195 = vadd.f32 0.0, %v1194
    %v1196 = vpop.f32.mrb[0].mxu0
    %1197 = vdwg.mxu0
    %v1199 = vsel %vm113, %v1122, 0
    %1201 = vmatprep.subr.mxu0 0.0
    %1202 = vmatpush1.msra.mxu0 %v33
    %1203 = vmatprep.subr.mxu0 0.0
    %1204 = vmatpush1.msra.mxu0 %v34
    %1205 = vmatprep.subr.mxu0 0.0
    %1206 = vmatpush1.msra.mxu0 0.0
    %1207 = vmatprep.subr.mxu0 0.0
    %1208 = vmatpush1.msra.mxu0 0.0
    %1209 = vmatprep.subr.mxu0 0.0
    %1210 = vmatpush1.msra.mxu0 0.0
    %1211 = vmatprep.subr.mxu0 0.0
    %1212 = vmatpush1.msra.mxu0 0.0
    %1213 = vmatprep.subr.mxu0 0.0
    %1214 = vmatpush1.msra.mxu0 0.0
    %1215 = vmatprep.subr.mxu0 0.0
    %1216 = vmatpush1.msra.mxu0 0.0
    %1217 = vmatprep.subr.mxu0 0.0
    %1218 = vmatpush1.msra.mxu0 0.0
    %1219 = vmatprep.subr.mxu0 0.0
    %1220 = vmatpush1.msra.mxu0 0.0
    %1221 = vmatprep.subr.mxu0 0.0
    %1222 = vmatpush1.msra.mxu0 0.0
    %1223 = vmatprep.subr.mxu0 0.0
    %1224 = vmatpush1.msra.mxu0 0.0
    %1225 = vmatprep.subr.mxu0 0.0
    %1226 = vmatpush1.msra.mxu0 0.0
    %1227 = vmatprep.subr.mxu0 0.0
    %1228 = vmatpush1.msra.mxu0 0.0
    %1229 = vmatprep.subr.mxu0 0.0
    %1230 = vmatpush1.msra.mxu0 0.0
    %1231 = vmatprep.subr.mxu0 0.0
    %1232 = vmatpush1.msra.mxu0 0.0
    %1233 = vmatprep.subr.mxu0 0.0
    %1234 = vmatpush1.msra.mxu0 0.0
    %1235 = vmatprep.subr.mxu0 0.0
    %1236 = vmatpush1.msra.mxu0 0.0
    %1237 = vmatprep.subr.mxu0 0.0
    %1238 = vmatpush1.msra.mxu0 0.0
    %1239 = vmatprep.subr.mxu0 0.0
    %1240 = vmatpush1.msra.mxu0 0.0
    %1241 = vmatprep.subr.mxu0 0.0
    %1242 = vmatpush1.msra.mxu0 0.0
    %1243 = vmatprep.subr.mxu0 0.0
    %1244 = vmatpush1.msra.mxu0 0.0
    %1245 = vmatprep.subr.mxu0 0.0
    %1246 = vmatpush1.msra.mxu0 0.0
    %1247 = vmatprep.subr.mxu0 0.0
    %1248 = vmatpush1.msra.mxu0 0.0
    %1249 = vmatprep.subr.mxu0 0.0
    %1250 = vmatpush1.msra.mxu0 0.0
    %1251 = vmatprep.subr.mxu0 0.0
    %1252 = vmatpush1.msra.mxu0 0.0
    %1253 = vmatprep.subr.mxu0 0.0
    %1254 = vmatpush1.msra.mxu0 0.0
    %1255 = vmatprep.subr.mxu0 0.0
    %1256 = vmatpush1.msra.mxu0 0.0
    %1257 = vmatprep.subr.mxu0 0.0
    %1258 = vmatpush1.msra.mxu0 0.0
    %1259 = vmatprep.subr.mxu0 0.0
    %1260 = vmatpush1.msra.mxu0 0.0
    %1261 = vmatprep.subr.mxu0 0.0
    %1262 = vmatpush1.msra.mxu0 0.0
    %1263 = vmatprep.subr.mxu0 0.0
    %1264 = vmatpush1.msra.mxu0 0.0
    %1265 = vmatprep.mubr.f32.mxu0 0.0
    %1266 = vmatmul.mubr.f32.gmra.mrb[0].mxu0 %v1199
    %v1267 = vpop.f32.mrb[0].mxu0
    %v1268 = vadd.f32 %v1195, %v1267
    %v1269 = vpop.f32.mrb[0].mxu0
    %1270 = vdwg.mxu0
    %v1271 = vsub.f32 0.0, %v1268
    %v1272 = vmul.f32 %v1271, 1.442695
    %v1273 = vpow.pop %v1272
    %v1274 = vadd.f32 %v1273, 1.0
    %v1275 = vrcp.pop %v1274
    %v1276 = vmul.f32 1.0, %v1275
    %v1277 = vtanh.pop %v1268
    %v1278 = vmul.f32 %v1276, %v1108
    %1280 = vrot.lane.b32.xlu0 %v1277, 64
    %v1281 = vpop.permute.xlu0 %1280
    %v1283 = vmul.f32 %v1276, %v1281
    %1285 = vrot.lane.b32.xlu0 %v1283, 32
    %v1286 = vpop.permute.xlu0 %1285
    %v1288 = vadd.f32 %v1278, %v1286
    %v1289 = vtanh.pop %v1288
    %1291 = vrot.lane.b32.xlu0 %v1289, 64
    %v1292 = vpop.permute.xlu0 %1291
    %v1294 = vmul.f32 %v1276, %v1292
    %s1295 = scalar_lea.vmem %s0, 56
    %v1296 = vld [vmem:[%s1295] sm:$0xff]
    %1297 = vset.pattern.permute.xlu0 0
    %1298 = vperm.xlu0 %1297, %v1296
    %v1299 = vpop.permute.xlu0 %1298
    %vm1300 = vcmp.eq.s32.totalorder %v1299, %v26
    %v1301 = vsel %vm1300, 1, 0
    %v1302 = vcvt.s32.f32 %v1301
    %1304 = vrot.lane.b32.xlu0 %v1294, 32
    %v1305 = vpop.permute.xlu0 %1304
    %v1306 = vsel %vm39, %v1305, 0
    %1308 = vmatprep.subr.mxu0 0.0
    %1309 = vmatpush1.msra.mxu0 %v35
    %1310 = vmatprep.subr.mxu0 0.0
    %1311 = vmatpush1.msra.mxu0 %v36
    %1312 = vmatprep.subr.mxu0 0.0
    %1313 = vmatpush1.msra.mxu0 %v37
    %1314 = vmatprep.subr.mxu0 0.0
    %1315 = vmatpush1.msra.mxu0 %v38
    %1316 = vmatprep.subr.mxu0 0.0
    %1317 = vmatpush1.msra.mxu0 0.0
    %1318 = vmatprep.subr.mxu0 0.0
    %1319 = vmatpush1.msra.mxu0 0.0
    %1320 = vmatprep.subr.mxu0 0.0
    %1321 = vmatpush1.msra.mxu0 0.0
    %1322 = vmatprep.subr.mxu0 0.0
    %1323 = vmatpush1.msra.mxu0 0.0
    %1324 = vmatprep.subr.mxu0 0.0
    %1325 = vmatpush1.msra.mxu0 0.0
    %1326 = vmatprep.subr.mxu0 0.0
    %1327 = vmatpush1.msra.mxu0 0.0
    %1328 = vmatprep.subr.mxu0 0.0
    %1329 = vmatpush1.msra.mxu0 0.0
    %1330 = vmatprep.subr.mxu0 0.0
    %1331 = vmatpush1.msra.mxu0 0.0
    %1332 = vmatprep.subr.mxu0 0.0
    %1333 = vmatpush1.msra.mxu0 0.0
    %1334 = vmatprep.subr.mxu0 0.0
    %1335 = vmatpush1.msra.mxu0 0.0
    %1336 = vmatprep.subr.mxu0 0.0
    %1337 = vmatpush1.msra.mxu0 0.0
    %1338 = vmatprep.subr.mxu0 0.0
    %1339 = vmatpush1.msra.mxu0 0.0
    %1340 = vmatprep.subr.mxu0 0.0
    %1341 = vmatpush1.msra.mxu0 0.0
    %1342 = vmatprep.subr.mxu0 0.0
    %1343 = vmatpush1.msra.mxu0 0.0
    %1344 = vmatprep.subr.mxu0 0.0
    %1345 = vmatpush1.msra.mxu0 0.0
    %1346 = vmatprep.subr.mxu0 0.0
    %1347 = vmatpush1.msra.mxu0 0.0
    %1348 = vmatprep.subr.mxu0 0.0
    %1349 = vmatpush1.msra.mxu0 0.0
    %1350 = vmatprep.subr.mxu0 0.0
    %1351 = vmatpush1.msra.mxu0 0.0
    %1352 = vmatprep.subr.mxu0 0.0
    %1353 = vmatpush1.msra.mxu0 0.0
    %1354 = vmatprep.subr.mxu0 0.0
    %1355 = vmatpush1.msra.mxu0 0.0
    %1356 = vmatprep.subr.mxu0 0.0
    %1357 = vmatpush1.msra.mxu0 0.0
    %1358 = vmatprep.subr.mxu0 0.0
    %1359 = vmatpush1.msra.mxu0 0.0
    %1360 = vmatprep.subr.mxu0 0.0
    %1361 = vmatpush1.msra.mxu0 0.0
    %1362 = vmatprep.subr.mxu0 0.0
    %1363 = vmatpush1.msra.mxu0 0.0
    %1364 = vmatprep.subr.mxu0 0.0
    %1365 = vmatpush1.msra.mxu0 0.0
    %1366 = vmatprep.subr.mxu0 0.0
    %1367 = vmatpush1.msra.mxu0 0.0
    %1368 = vmatprep.subr.mxu0 0.0
    %1369 = vmatpush1.msra.mxu0 0.0
    %1370 = vmatprep.subr.mxu0 0.0
    %1371 = vmatpush1.msra.mxu0 0.0
    %1372 = vmatprep.mubr.f32.mxu0 0.0
    %1373 = vmatmul.mubr.f32.gmra.mrb[0].mxu0 %v1306
    %v1374 = vpop.f32.mrb[0].mxu0
    %v1375 = vadd.f32 0.0, %v1374
    %v1376 = vpop.f32.mrb[0].mxu0
    %1377 = vdwg.mxu0
    %v1379 = vsel %vm113, %v1302, 0
    %1381 = vmatprep.subr.mxu0 0.0
    %1382 = vmatpush1.msra.mxu0 %v33
    %1383 = vmatprep.subr.mxu0 0.0
    %1384 = vmatpush1.msra.mxu0 %v34
    %1385 = vmatprep.subr.mxu0 0.0
    %1386 = vmatpush1.msra.mxu0 0.0
    %1387 = vmatprep.subr.mxu0 0.0
    %1388 = vmatpush1.msra.mxu0 0.0
    %1389 = vmatprep.subr.mxu0 0.0
    %1390 = vmatpush1.msra.mxu0 0.0
    %1391 = vmatprep.subr.mxu0 0.0
    %1392 = vmatpush1.msra.mxu0 0.0
    %1393 = vmatprep.subr.mxu0 0.0
    %1394 = vmatpush1.msra.mxu0 0.0
    %1395 = vmatprep.subr.mxu0 0.0
    %1396 = vmatpush1.msra.mxu0 0.0
    %1397 = vmatprep.subr.mxu0 0.0
    %1398 = vmatpush1.msra.mxu0 0.0
    %1399 = vmatprep.subr.mxu0 0.0
    %1400 = vmatpush1.msra.mxu0 0.0
    %1401 = vmatprep.subr.mxu0 0.0
    %1402 = vmatpush1.msra.mxu0 0.0
    %1403 = vmatprep.subr.mxu0 0.0
    %1404 = vmatpush1.msra.mxu0 0.0
    %1405 = vmatprep.subr.mxu0 0.0
    %1406 = vmatpush1.msra.mxu0 0.0
    %1407 = vmatprep.subr.mxu0 0.0
    %1408 = vmatpush1.msra.mxu0 0.0
    %1409 = vmatprep.subr.mxu0 0.0
    %1410 = vmatpush1.msra.mxu0 0.0
    %1411 = vmatprep.subr.mxu0 0.0
    %1412 = vmatpush1.msra.mxu0 0.0
    %1413 = vmatprep.subr.mxu0 0.0
    %1414 = vmatpush1.msra.mxu0 0.0
    %1415 = vmatprep.subr.mxu0 0.0
    %1416 = vmatpush1.msra.mxu0 0.0
    %1417 = vmatprep.subr.mxu0 0.0
    %1418 = vmatpush1.msra.mxu0 0.0
    %1419 = vmatprep.subr.mxu0 0.0
    %1420 = vmatpush1.msra.mxu0 0.0
    %1421 = vmatprep.subr.mxu0 0.0
    %1422 = vmatpush1.msra.mxu0 0.0
    %1423 = vmatprep.subr.mxu0 0.0
    %1424 = vmatpush1.msra.mxu0 0.0
    %1425 = vmatprep.subr.mxu0 0.0
    %1426 = vmatpush1.msra.mxu0 0.0
    %1427 = vmatprep.subr.mxu0 0.0
    %1428 = vmatpush1.msra.mxu0 0.0
    %1429 = vmatprep.subr.mxu0 0.0
    %1430 = vmatpush1.msra.mxu0 0.0
    %1431 = vmatprep.subr.mxu0 0.0
    %1432 = vmatpush1.msra.mxu0 0.0
    %1433 = vmatprep.subr.mxu0 0.0
    %1434 = vmatpush1.msra.mxu0 0.0
    %1435 = vmatprep.subr.mxu0 0.0
    %1436 = vmatpush1.msra.mxu0 0.0
    %1437 = vmatprep.subr.mxu0 0.0
    %1438 = vmatpush1.msra.mxu0 0.0
    %1439 = vmatprep.subr.mxu0 0.0
    %1440 = vmatpush1.msra.mxu0 0.0
    %1441 = vmatprep.subr.mxu0 0.0
    %1442 = vmatpush1.msra.mxu0 0.0
    %1443 = vmatprep.subr.mxu0 0.0
    %1444 = vmatpush1.msra.mxu0 0.0
    %1445 = vmatprep.mubr.f32.mxu0 0.0
    %1446 = vmatmul.mubr.f32.gmra.mrb[0].mxu0 %v1379
    %v1447 = vpop.f32.mrb[0].mxu0
    %v1448 = vadd.f32 %v1375, %v1447
    %v1449 = vpop.f32.mrb[0].mxu0
    %1450 = vdwg.mxu0
    %v1451 = vsub.f32 0.0, %v1448
    %v1452 = vmul.f32 %v1451, 1.442695
    %v1453 = vpow.pop %v1452
    %v1454 = vadd.f32 %v1453, 1.0
    %v1455 = vrcp.pop %v1454
    %v1456 = vmul.f32 1.0, %v1455
    %v1457 = vtanh.pop %v1448
    %v1458 = vmul.f32 %v1456, %v1288
    %1460 = vrot.lane.b32.xlu0 %v1457, 64
    %v1461 = vpop.permute.xlu0 %1460
    %v1463 = vmul.f32 %v1456, %v1461
    %1465 = vrot.lane.b32.xlu0 %v1463, 32
    %v1466 = vpop.permute.xlu0 %1465
    %v1468 = vadd.f32 %v1458, %v1466
    %v1469 = vtanh.pop %v1468
    %1471 = vrot.lane.b32.xlu0 %v1469, 64
    %v1472 = vpop.permute.xlu0 %1471
    %v1474 = vmul.f32 %v1456, %v1472
    %1476 = vrot.lane.b32.xlu0 %v1474, 32
    %v1477 = vpop.permute.xlu0 %1476
    %1479 = vst.msk [vmem:[#allocation2] sm:$0xff] %vm39, %v1477
    %1481 = vrot.lane.b32.xlu0 %v1468, 96
    %v1482 = vpop.permute.xlu0 %1481
    %1484 = vst.msk [vmem:[#allocation3] sm:$0xff] %vm39, %v1482
    // Predicated region
    $region18: #{tpu_custom_call.1} parent=1 // pred_check
      %p1485 = pneg %p15
    $region19: #{tpu_custom_call.1} parent=1 // pred_check_branch
      %1487 = sbr.rel (%p1485) target = $region21
    $region20: #{tpu_custom_call.1} parent=1 // pred_region
      %v1488 = vld [vmem:[#allocation2] sm:$0xff]
      %1489 = vst.msk [vmem:[#allocation4] sm:$0xff] %vm39, %v1488
    $region21: #{tpu_custom_call.1} parent=1 // pred_fallthru
      _
    // Predicated region
    $region22: #{tpu_custom_call.1} parent=1 // pred_check
      _
    $region23: #{tpu_custom_call.1} parent=1 // pred_check_branch
      %1491 = sbr.rel (0) target = $region25
    $region24: #{tpu_custom_call.1} parent=1 // pred_region
      %s1493 = ssub.s32 128, 128
      %1494 = vsyncadd [#allocation5], %s1493
      %s1496 = sshll.u32 [#allocation4], 4
      %s1497 = int_to_ptr.vmem [resolvable:$true] %s1496
      %1499 = dma.vmem_to_hbm [thread:$0]  %s1497, 128, %s3, [#allocation5]
    $region25: #{tpu_custom_call.1} parent=1 // pred_fallthru
      _
    // Predicated region
    $region26: #{tpu_custom_call.1} parent=1 // pred_check
      _
    $region27: #{tpu_custom_call.1} parent=1 // pred_check_branch
      %1501 = sbr.rel (0) target = $region29
    $region28: #{tpu_custom_call.1} parent=1 // pred_region
      %1502 = dma.done [#allocation5], 128
    $region29: #{tpu_custom_call.1} parent=1 // pred_fallthru
      _
    %1503 = vsyncpa [#allocation5], 1

</llo_original>
